<compile_context>
chip_gen: v7x
topology: tpu7x:2x2x1
jax: 0.10.0
libtpu: 0.0.40
codegen_flags: <defaults>
</compile_context>

<pallas_src>
import jax
import jax.numpy as jnp
from jax.experimental import pallas as pl
from jax.experimental.pallas import tpu as pltpu

# MXU matmul operands (fp32 accumulation).  Set to jnp.float32 for a strict-fp32 run.
MXU_DTYPE = jnp.bfloat16
# Sized for the smallest target (v7x: 64 MiB physical VMEM) with headroom; the resident
# weight panels + double-buffered activation tiles here are only a few MiB.
VMEM_LIMIT_BYTES = 48 * 1024 * 1024
LN_EPS = 1e-5


# --------------------------- Pallas kernels ---------------------------------

def _attn_branch_kernel(x_ref, g_ref, b_ref, wq_ref, wk_ref, wv_ref, wo_ref,
                        cos_ref, sin_ref, mask_ref, o_ref):
    """x + linear_2(linear_attention(rope(q), rope(k), v)) for one batch element.

    All heads are processed together in a lane-dense (S, E) layout.  The per-head
    structure (score softmax over c, final softmax over k) is expressed with the
    precomputed same-head 0/1 mask `mask_ref` instead of reshapes / transposes.
    """
    E = x_ref.shape[-1]
    x = x_ref[...]                                              # (S, E) fp32

    # ---- layer_norm_1 (biased variance, eps inside rsqrt, affine) ----
    mu = jnp.mean(x, axis=-1, keepdims=True)
    xc = x - mu
    var = jnp.mean(xc * xc, axis=-1, keepdims=True)
    h = xc * jax.lax.rsqrt(var + LN_EPS) * g_ref[...] + b_ref[...]
    hb = h.astype(MXU_DTYPE)

    # ---- linear_1 (bias-free QKV projection) ----
    q = jnp.dot(hb, wq_ref[...], preferred_element_type=jnp.float32)   # (S, E)
    k = jnp.dot(hb, wk_ref[...], preferred_element_type=jnp.float32)
    v = jnp.dot(hb, wv_ref[...], preferred_element_type=jnp.float32)

    # ---- RoPE ----
    # Weights / tables were permuted to a half-split pair basis, so rotate_half is a
    # single lane rotation by E//2 (same result for either roll direction) and the
    # rotation sign is folded into sin_ref.  No MXU, no concatenates.
    cos = cos_ref[...]
    sin = sin_ref[...]
    qr = q * cos + pltpu.roll(q, E // 2, 1) * sin
    kr = k * cos + pltpu.roll(k, E // 2, 1) * sin

    # ---- linear_attention, exactly as written in the reference ----
    mask = mask_ref[...]                                        # (E, E) same-head 0/1
    # kvt[c, r] = sum_n v[n, c] * (k_rope[n, r] / 4)   (per-head score, stored transposed)
    kvt = jax.lax.dot_general(
        v.astype(MXU_DTYPE), (kr * 0.25).astype(MXU_DTYPE),
        (((0,), (0,)), ((), ())), preferred_element_type=jnp.float32)
    # softmax over c (rows), restricted to c in the same head as r
    kvm = jnp.where(mask > 0.0, kvt, jnp.float32(-1e30))
    col_max = jnp.max(kvm, axis=0, keepdims=True)               # (1, E)
    p = jnp.exp(kvm - col_max)                                  # off-head rows -> 0
    denom = jnp.sum(p, axis=0, keepdims=True)                   # (1, E), >= 1
    score_t = p / denom
    ssum = jnp.sum(score_t, axis=0, keepdims=True)              # (1, E): sum_c score[r, c]

    # z[n, r] = q_rope[n, r]/4 * sum_c score[r, c]; then per-head softmax over r.
    z = qr * 0.25 * ssum                                        # (S, E)
    row_max = jnp.max(z, axis=-1, keepdims=True)                # global row max (>= head max)
    pz = jnp.exp(z - row_max)
    seg = jnp.dot(pz, mask, preferred_element_type=jnp.float32)  # per-head row sums (segment sum)
    attn = pz / jnp.maximum(seg, jnp.float32(1e-30))            # == per-head softmax

    # ---- linear_2 (bias-free) + residual ----
    o_ref[...] = x + jnp.dot(attn.astype(MXU_DTYPE), wo_ref[...],
                             preferred_element_type=jnp.float32)


def _mlp_branch_kernel(x_ref, g_ref, b_ref, w1_ref, b1_ref, w2_ref, b2_ref, o_ref):
    """x + Linear(3E->E)(SiLU(Linear(E->3E)(layer_norm_1(x)))) for one row tile."""
    x = x_ref[...]                                              # (tm, E) fp32
    mu = jnp.mean(x, axis=-1, keepdims=True)
    xc = x - mu
    var = jnp.mean(xc * xc, axis=-1, keepdims=True)
    h = xc * jax.lax.rsqrt(var + LN_EPS) * g_ref[...] + b_ref[...]
    h1 = jnp.dot(h.astype(MXU_DTYPE), w1_ref[...],
                 preferred_element_type=jnp.float32) + b1_ref[...]
    h1 = h1 * (1.0 / (1.0 + jnp.exp(-h1)))                      # SiLU (fp32, EUP exp)
    h2 = jnp.dot(h1.astype(MXU_DTYPE), w2_ref[...],
                 preferred_element_type=jnp.float32) + b2_ref[...]
    o_ref[...] = x + h2


# --------------------------- wrappers ----------------------------------------

def _pick_row_tile(m):
    # Largest tile that (a) divides the row count, (b) keeps >= 2 blocks so the grid can
    # shard across the 2 TensorCores on v7x, (c) respects the (8, 128) block constraint.
    for t in (512, 256, 128, 64, 32, 16, 8):
        if m % t == 0 and m // t >= 2:
            return t
    for t in (512, 256, 128, 64, 32, 16, 8):
        if m % t == 0:
            return t
    return m


def residual_block(x, p):
    """Pallas forward pass of ResidualBlock (params from prepare_params)."""
    B, S, E = x.shape
    assert p['rope_cos'].shape == (S, E), "RoPE tables were prepared for a different seq_len"
    cparams = pltpu.CompilerParams(dimension_semantics=("parallel",),
                                   vmem_limit_bytes=VMEM_LIMIT_BYTES)
    full2d = lambda i: (0, 0)   # resident (loaded-once) operands

    # ---- branch 1: x = x + attention(layer_norm_1(x)) : one fused kernel, grid over B.
    # TODO(synk): for very long sequences, split this into a two-pass S-tiled pipeline
    # (kv statistics, then outputs) since the score needs the full sequence per batch.
    x = pl.pallas_call(
        _attn_branch_kernel,
        out_shape=jax.ShapeDtypeStruct((B, S, E), jnp.float32),
        grid=(B,),
        in_specs=[
            pl.BlockSpec((None, S, E), lambda b: (b, 0, 0)),     # x (leading dim squeezed)
            pl.BlockSpec((1, E), full2d),                        # LN gamma
            pl.BlockSpec((1, E), full2d),                        # LN beta
            pl.BlockSpec((E, E), full2d),                        # w_q (bf16, permuted)
            pl.BlockSpec((E, E), full2d),                        # w_k
            pl.BlockSpec((E, E), full2d),                        # w_v
            pl.BlockSpec((E, E), full2d),                        # w_out
            pl.BlockSpec((S, E), full2d),                        # rope cos
            pl.BlockSpec((S, E), full2d),                        # rope sin (sign folded in)
            pl.BlockSpec((E, E), full2d),                        # same-head mask
        ],
        out_specs=pl.BlockSpec((None, S, E), lambda b: (b, 0, 0)),
        compiler_params=cparams,
    )(x, p['ln1_g'], p['ln1_b'], p['wq'], p['wk'], p['wv'], p['wo'],
      p['rope_cos'], p['rope_sin'], p['head_mask'])

    # ---- branch 2: x = x + mlp(layer_norm_1(x)) : one fused kernel, grid over row tiles.
    M = B * S
    tm = _pick_row_tile(M)
    x2 = x.reshape(M, E)                      # contiguous reshape, no relayout
    y = pl.pallas_call(
        _mlp_branch_kernel,
        out_shape=jax.ShapeDtypeStruct((M, E), jnp.float32),
        grid=(M // tm,),
        in_specs=[
            pl.BlockSpec((tm, E), lambda i: (i, 0)),
            pl.BlockSpec((1, E), full2d),
            pl.BlockSpec((1, E), full2d),
            pl.BlockSpec((E, 3 * E), full2d),
            pl.BlockSpec((1, 3 * E), full2d),
            pl.BlockSpec((3 * E, E), full2d),
            pl.BlockSpec((1, E), full2d),
        ],
        out_specs=pl.BlockSpec((tm, E), lambda i: (i, 0)),
        compiler_params=cparams,
    )(x2, p['ln1_g'], p['ln1_b'], p['mlp_w1'], p['mlp_b1'], p['mlp_w2'], p['mlp_b2'])
    return y.reshape(B, S, E)


# --------------------------- parameters --------------------------------------

def init_reference_params(key, E):
    """Parameters in the PyTorch module's layout (weights stored as (in, out))."""
    ks = jax.random.split(key, 8)
    w = lambda k, shape, s=0.05: s * jax.random.normal(k, shape, dtype=jnp.float32)
    return dict(
        ln1_g=1.0 + w(ks[0], (E,)),
        ln1_b=w(ks[1], (E,)),
        attn_w1=w(ks[2], (E, 3 * E)),   # linear_1 (bias-free): cols = (q | k | v), each (h, e)
        attn_w2=w(ks[3], (E, E)),       # linear_2 (bias-free)
        mlp_w1=w(ks[4], (E, 3 * E)),
        mlp_b1=w(ks[5], (3 * E,)),
        mlp_w2=w(ks[6], (3 * E, E)),
        mlp_b2=w(ks[7], (E,)),
    )


def prepare_params(ref, *, seq_len, heads):
    """Repack reference parameters for the fused kernels.

    The reference RoPE is the interleaved (GPT-J) variant: pairs (2i, 2i+1) inside each
    head are rotated.  We permute the q/k/v projection columns (and the matching rows of
    the output projection) so the two pair elements sit at (m, m + E/2); rotate_half then
    becomes a single lane roll by E//2 with its sign folded into the sin table.  The
    same-head softmax structure is encoded in a 0/1 mask.  This is an exact
    re-parameterisation of the module -- the forward function is unchanged.
    """
    E = ref['attn_w2'].shape[0]
    assert E % heads == 0 and (E // heads) % 2 == 0
    e = E // heads
    e2 = e // 2
    E2 = E // 2

    hh = jnp.arange(heads)[:, None]
    ii = jnp.arange(e2)[None, :]
    first = (hh * e + 2 * ii).reshape(-1)        # new col m (< E/2)  <- old col h*e + 2i
    second = (hh * e + 2 * ii + 1).reshape(-1)   # new col m (>= E/2) <- old col h*e + 2i + 1
    src = jnp.concatenate([first, second])       # (E,)

    wq = ref['attn_w1'][:, 0 * E:1 * E][:, src]
    wk = ref['attn_w1'][:, 1 * E:2 * E][:, src]
    wv = ref['attn_w1'][:, 2 * E:3 * E][:, src]
    wo = ref['attn_w2'][src, :]

    # RoPE tables in the permuted basis (frequencies repeat per head, halves identical).
    theta = 1.0 / (10000.0 ** (jnp.arange(0, e, 2, dtype=jnp.float32) / e))   # (e/2,)
    freq = jnp.concatenate([jnp.tile(theta, heads)] * 2)                      # (E,)
    pos = jnp.arange(seq_len, dtype=jnp.float32)
    enc = pos[:, None] * freq[None, :]                                        # (S, E)
    sign = jnp.concatenate([-jnp.ones((E2,), jnp.float32),
                            jnp.ones((E2,), jnp.float32)])

    # 0/1 indicator of "same attention head" in the permuted basis.
    head_id = (jnp.arange(E) % E2) // e2
    head_mask = (head_id[:, None] == head_id[None, :]).astype(jnp.float32)

    return dict(
        ln1_g=ref['ln1_g'].reshape(1, E),
        ln1_b=ref['ln1_b'].reshape(1, E),
        wq=wq.astype(MXU_DTYPE),
        wk=wk.astype(MXU_DTYPE),
        wv=wv.astype(MXU_DTYPE),
        wo=wo.astype(MXU_DTYPE),
        rope_cos=jnp.cos(enc),
        rope_sin=jnp.sin(enc) * sign[None, :],
        head_mask=head_mask,
        mlp_w1=ref['mlp_w1'].astype(MXU_DTYPE),
        mlp_b1=ref['mlp_b1'].reshape(1, 3 * E),
        mlp_w2=ref['mlp_w2'].astype(MXU_DTYPE),
        mlp_b2=ref['mlp_b2'].reshape(1, E),
    )


# ---------------- pure-JAX transcription of the PyTorch module (for self-check) -------

def reference_forward(x, ref, *, heads):
    B, S, E = x.shape
    e = E // heads

    def layer_norm(t):
        mu = jnp.mean(t, axis=-1, keepdims=True)
        var = jnp.mean((t - mu) ** 2, axis=-1, keepdims=True)
        return (t - mu) / jnp.sqrt(var + LN_EPS) * ref['ln1_g'] + ref['ln1_b']

    def rope(t):  # t: (B, H, S, e); interleaved (GPT-J) rotation, as in the module
        theta = 1.0 / (10000.0 ** (jnp.arange(0, e, 2, dtype=jnp.float32) / e))
        enc = jnp.repeat(jnp.arange(S, dtype=jnp.float32)[:, None] * theta[None, :],
                         2, axis=-1)
        x1, x2 = t[..., 0::2], t[..., 1::2]
        rot = jnp.stack([-x2, x1], axis=-1).reshape(t.shape)
        return t * jnp.cos(enc) + rot * jnp.sin(enc)

    h = layer_norm(x)
    qkv = (h @ ref['attn_w1']).reshape(B, S, 3, heads, e).transpose(2, 0, 3, 1, 4)
    q, k, v = rope(qkv[0]), rope(qkv[1]), qkv[2]
    score = jax.nn.softmax(jnp.einsum('bhnk,bhnc->bhkc', k / 4, v), axis=-1)
    z = jnp.einsum('bhnk,bhkc->bhnk', q / 4, score)
    a = jax.nn.softmax(z, axis=-1).transpose(0, 2, 1, 3).reshape(B, S, E)
    x = x + a @ ref['attn_w2']

    h = layer_norm(x)          # the reference reuses layer_norm_1 here as well
    h1 = h @ ref['mlp_w1'] + ref['mlp_b1']
    h1 = h1 * jax.nn.sigmoid(h1)
    return x + h1 @ ref['mlp_w2'] + ref['mlp_b2']


# --------------------------- main ---------------------------------------------

if __name__ == "__main__":
    E, heads = 32, 4
    B, S = 2, 8
    key = jax.random.PRNGKey(0)
    kx, kp = jax.random.split(key)
    x = jax.random.normal(kx, (B, S, E), dtype=jnp.float32)

    ref_params = init_reference_params(kp, E)
    params = prepare_params(ref_params, seq_len=S, heads=heads)

    fwd = jax.jit(residual_block)
    y = fwd(x, params)
    jax.block_until_ready(y)

    assert y.shape == (B, S, E), y.shape
    assert bool(jnp.all(jnp.isfinite(y)))

    # numerical sanity check against the pure-JAX transcription of the PyTorch module
    # (loose tolerance: the kernels feed the MXU in bf16).
    y_ref = reference_forward(x, ref_params, heads=heads)
    assert float(jnp.max(jnp.abs(y - y_ref))) < 5e-2

    print("KERNEL_OK")
</pallas_src>

<mosaic_0001>
module attributes {stable_mosaic.version = 11 : i64} {
  func.func @_attn_branch_kernel(%arg0: i32, %arg1: memref<1x8x32xf32, #tpu.memory_space<vmem>>, %arg2: memref<1x32xf32, #tpu.memory_space<vmem>>, %arg3: memref<1x32xf32, #tpu.memory_space<vmem>>, %arg4: memref<32x32xbf16, #tpu.memory_space<vmem>>, %arg5: memref<32x32xbf16, #tpu.memory_space<vmem>>, %arg6: memref<32x32xbf16, #tpu.memory_space<vmem>>, %arg7: memref<32x32xbf16, #tpu.memory_space<vmem>>, %arg8: memref<8x32xf32, #tpu.memory_space<vmem>>, %arg9: memref<8x32xf32, #tpu.memory_space<vmem>>, %arg10: memref<32x32xf32, #tpu.memory_space<vmem>>, %arg11: memref<1x8x32xf32, #tpu.memory_space<vmem>>) attributes {dimension_semantics = [#tpu.dimension_semantics<parallel>], iteration_bounds = array<i64: 2>, scalar_prefetch = 0 : i64, scratch_operands = 0 : i64, tpu.core_type = #tpu.core_type<tc>, window_params = [{transform_indices = @transform_0, window_bounds = array<i64: 1, 8, 32>}, {pipeline_mode = #tpu.pipeline_mode<synchronous>, transform_indices = @transform_1, window_bounds = array<i64: 1, 32>}, {pipeline_mode = #tpu.pipeline_mode<synchronous>, transform_indices = @transform_2, window_bounds = array<i64: 1, 32>}, {pipeline_mode = #tpu.pipeline_mode<synchronous>, transform_indices = @transform_3, window_bounds = array<i64: 32, 32>}, {pipeline_mode = #tpu.pipeline_mode<synchronous>, transform_indices = @transform_4, window_bounds = array<i64: 32, 32>}, {pipeline_mode = #tpu.pipeline_mode<synchronous>, transform_indices = @transform_5, window_bounds = array<i64: 32, 32>}, {pipeline_mode = #tpu.pipeline_mode<synchronous>, transform_indices = @transform_6, window_bounds = array<i64: 32, 32>}, {pipeline_mode = #tpu.pipeline_mode<synchronous>, transform_indices = @transform_7, window_bounds = array<i64: 8, 32>}, {pipeline_mode = #tpu.pipeline_mode<synchronous>, transform_indices = @transform_8, window_bounds = array<i64: 8, 32>}, {pipeline_mode = #tpu.pipeline_mode<synchronous>, transform_indices = @transform_9, window_bounds = array<i64: 32, 32>}, {transform_indices = @transform_10, window_bounds = array<i64: 1, 8, 32>}]} {
    %c0 = arith.constant 0 : index
    %c0_0 = arith.constant 0 : index
    %c0_1 = arith.constant 0 : index
    %0 = vector.load %arg1[%c0, %c0_0, %c0_1] : memref<1x8x32xf32, #tpu.memory_space<vmem>>, vector<1x8x32xf32>
    %1 = vector.shape_cast %0 : vector<1x8x32xf32> to vector<8x32xf32>
    %cst = arith.constant dense<0.000000e+00> : vector<8xf32>
    %2 = vector.multi_reduction <add>, %1, %cst [1] : vector<8x32xf32> to vector<8xf32>
    %3 = vector.shape_cast %2 : vector<8xf32> to vector<8x1xf32>
    %cst_2 = arith.constant 3.200000e+01 : f32
    %4 = vector.broadcast %cst_2 : f32 to vector<8x1xf32>
    %5 = arith.divf %3, %4 : vector<8x1xf32>
    %6 = vector.broadcast %5 : vector<8x1xf32> to vector<8x32xf32>
    %7 = arith.subf %1, %6 : vector<8x32xf32>
    %8 = arith.mulf %7, %7 : vector<8x32xf32>
    %cst_3 = arith.constant dense<0.000000e+00> : vector<8xf32>
    %9 = vector.multi_reduction <add>, %8, %cst_3 [1] : vector<8x32xf32> to vector<8xf32>
    %10 = vector.shape_cast %9 : vector<8xf32> to vector<8x1xf32>
    %cst_4 = arith.constant 3.200000e+01 : f32
    %11 = vector.broadcast %cst_4 : f32 to vector<8x1xf32>
    %12 = arith.divf %10, %11 : vector<8x1xf32>
    %cst_5 = arith.constant 9.99999974E-6 : f32
    %13 = vector.broadcast %cst_5 : f32 to vector<8x1xf32>
    %14 = arith.addf %12, %13 : vector<8x1xf32>
    %15 = math.rsqrt %14 : vector<8x1xf32>
    %16 = vector.broadcast %15 : vector<8x1xf32> to vector<8x32xf32>
    %17 = arith.mulf %7, %16 : vector<8x32xf32>
    %c0_6 = arith.constant 0 : index
    %c0_7 = arith.constant 0 : index
    %18 = vector.load %arg2[%c0_6, %c0_7] : memref<1x32xf32, #tpu.memory_space<vmem>>, vector<1x32xf32>
    %19 = vector.broadcast %18 : vector<1x32xf32> to vector<8x32xf32>
    %20 = arith.mulf %17, %19 : vector<8x32xf32>
    %c0_8 = arith.constant 0 : index
    %c0_9 = arith.constant 0 : index
    %21 = vector.load %arg3[%c0_8, %c0_9] : memref<1x32xf32, #tpu.memory_space<vmem>>, vector<1x32xf32>
    %22 = vector.broadcast %21 : vector<1x32xf32> to vector<8x32xf32>
    %23 = arith.addf %20, %22 : vector<8x32xf32>
    %24 = arith.truncf %23 : vector<8x32xf32> to vector<8x32xbf16>
    %c0_10 = arith.constant 0 : index
    %c0_11 = arith.constant 0 : index
    %25 = vector.load %arg4[%c0_10, %c0_11] : memref<32x32xbf16, #tpu.memory_space<vmem>>, vector<32x32xbf16>
    %cst_12 = arith.constant dense<0.000000e+00> : vector<8x32xf32>
    %26 = tpu.matmul %24, %25, %cst_12 {dimension_numbers = #tpu.dot_dimension_numbers<[1], [0], [0], [1], [0, 0, 1, 1], [], []>} : vector<8x32xbf16>, vector<32x32xbf16>, vector<8x32xf32> -> vector<8x32xf32>
    %c0_13 = arith.constant 0 : index
    %c0_14 = arith.constant 0 : index
    %27 = vector.load %arg5[%c0_13, %c0_14] : memref<32x32xbf16, #tpu.memory_space<vmem>>, vector<32x32xbf16>
    %cst_15 = arith.constant dense<0.000000e+00> : vector<8x32xf32>
    %28 = tpu.matmul %24, %27, %cst_15 {dimension_numbers = #tpu.dot_dimension_numbers<[1], [0], [0], [1], [0, 0, 1, 1], [], []>} : vector<8x32xbf16>, vector<32x32xbf16>, vector<8x32xf32> -> vector<8x32xf32>
    %c0_16 = arith.constant 0 : index
    %c0_17 = arith.constant 0 : index
    %29 = vector.load %arg6[%c0_16, %c0_17] : memref<32x32xbf16, #tpu.memory_space<vmem>>, vector<32x32xbf16>
    %cst_18 = arith.constant dense<0.000000e+00> : vector<8x32xf32>
    %30 = tpu.matmul %24, %29, %cst_18 {dimension_numbers = #tpu.dot_dimension_numbers<[1], [0], [0], [1], [0, 0, 1, 1], [], []>} : vector<8x32xbf16>, vector<32x32xbf16>, vector<8x32xf32> -> vector<8x32xf32>
    %c0_19 = arith.constant 0 : index
    %c0_20 = arith.constant 0 : index
    %31 = vector.load %arg8[%c0_19, %c0_20] : memref<8x32xf32, #tpu.memory_space<vmem>>, vector<8x32xf32>
    %c0_21 = arith.constant 0 : index
    %c0_22 = arith.constant 0 : index
    %32 = vector.load %arg9[%c0_21, %c0_22] : memref<8x32xf32, #tpu.memory_space<vmem>>, vector<8x32xf32>
    %33 = arith.mulf %26, %31 : vector<8x32xf32>
    %c16_i32 = arith.constant 16 : i32
    %34 = tpu.dynamic_rotate %26 by %c16_i32 dim 1 : vector<8x32xf32>, i32 -> vector<8x32xf32>
    %35 = arith.mulf %34, %32 : vector<8x32xf32>
    %36 = arith.addf %33, %35 : vector<8x32xf32>
    %37 = arith.mulf %28, %31 : vector<8x32xf32>
    %c16_i32_23 = arith.constant 16 : i32
    %38 = tpu.dynamic_rotate %28 by %c16_i32_23 dim 1 : vector<8x32xf32>, i32 -> vector<8x32xf32>
    %39 = arith.mulf %38, %32 : vector<8x32xf32>
    %40 = arith.addf %37, %39 : vector<8x32xf32>
    %c0_24 = arith.constant 0 : index
    %c0_25 = arith.constant 0 : index
    %41 = vector.load %arg10[%c0_24, %c0_25] : memref<32x32xf32, #tpu.memory_space<vmem>>, vector<32x32xf32>
    %42 = arith.truncf %30 : vector<8x32xf32> to vector<8x32xbf16>
    %cst_26 = arith.constant 2.500000e-01 : f32
    %43 = vector.broadcast %cst_26 : f32 to vector<8x32xf32>
    %44 = arith.mulf %40, %43 : vector<8x32xf32>
    %45 = arith.truncf %44 : vector<8x32xf32> to vector<8x32xbf16>
    %cst_27 = arith.constant dense<0.000000e+00> : vector<32x32xf32>
    %46 = tpu.matmul %42, %45, %cst_27 {dimension_numbers = #tpu.dot_dimension_numbers<[0], [0], [1], [1], [0, 1, 1, 1], [], []>} : vector<8x32xbf16>, vector<8x32xbf16>, vector<32x32xf32> -> vector<32x32xf32>
    %cst_28 = arith.constant 0.000000e+00 : f32
    %47 = vector.broadcast %cst_28 : f32 to vector<32x32xf32>
    %48 = arith.cmpf ogt, %41, %47 : vector<32x32xf32>
    %cst_29 = arith.constant -1.000000e+30 : f32
    %49 = vector.broadcast %cst_29 : f32 to vector<32x32xf32>
    %50 = arith.select %48, %46, %49 : vector<32x32xi1>, vector<32x32xf32>
    %cst_30 = arith.constant dense<0xFF800000> : vector<32xf32>
    %51 = vector.multi_reduction <maximumf>, %50, %cst_30 [0] : vector<32x32xf32> to vector<32xf32>
    %52 = vector.shape_cast %51 : vector<32xf32> to vector<1x32xf32>
    %53 = vector.broadcast %52 : vector<1x32xf32> to vector<32x32xf32>
    %54 = arith.subf %50, %53 : vector<32x32xf32>
    %55 = math.exp %54 : vector<32x32xf32>
    %cst_31 = arith.constant dense<0.000000e+00> : vector<32xf32>
    %56 = vector.multi_reduction <add>, %55, %cst_31 [0] : vector<32x32xf32> to vector<32xf32>
    %57 = vector.shape_cast %56 : vector<32xf32> to vector<1x32xf32>
    %58 = vector.broadcast %57 : vector<1x32xf32> to vector<32x32xf32>
    %59 = arith.divf %55, %58 : vector<32x32xf32>
    %cst_32 = arith.constant dense<0.000000e+00> : vector<32xf32>
    %60 = vector.multi_reduction <add>, %59, %cst_32 [0] : vector<32x32xf32> to vector<32xf32>
    %61 = vector.shape_cast %60 : vector<32xf32> to vector<1x32xf32>
    %cst_33 = arith.constant 2.500000e-01 : f32
    %62 = vector.broadcast %cst_33 : f32 to vector<8x32xf32>
    %63 = arith.mulf %36, %62 : vector<8x32xf32>
    %64 = vector.broadcast %61 : vector<1x32xf32> to vector<8x32xf32>
    %65 = arith.mulf %63, %64 : vector<8x32xf32>
    %cst_34 = arith.constant dense<0xFF800000> : vector<8xf32>
    %66 = vector.multi_reduction <maximumf>, %65, %cst_34 [1] : vector<8x32xf32> to vector<8xf32>
    %67 = vector.shape_cast %66 : vector<8xf32> to vector<8x1xf32>
    %68 = vector.broadcast %67 : vector<8x1xf32> to vector<8x32xf32>
    %69 = arith.subf %65, %68 : vector<8x32xf32>
    %70 = math.exp %69 : vector<8x32xf32>
    %cst_35 = arith.constant dense<0.000000e+00> : vector<8x32xf32>
    %71 = tpu.matmul %70, %41, %cst_35 {dimension_numbers = #tpu.dot_dimension_numbers<[1], [0], [0], [1], [0, 0, 1, 1], [], []>} : vector<8x32xf32>, vector<32x32xf32>, vector<8x32xf32> -> vector<8x32xf32>
    %cst_36 = arith.constant 1.000000e-30 : f32
    %72 = vector.broadcast %cst_36 : f32 to vector<8x32xf32>
    %73 = arith.maximumf %71, %72 : vector<8x32xf32>
    %74 = arith.divf %70, %73 : vector<8x32xf32>
    %75 = arith.truncf %74 : vector<8x32xf32> to vector<8x32xbf16>
    %c0_37 = arith.constant 0 : index
    %c0_38 = arith.constant 0 : index
    %76 = vector.load %arg7[%c0_37, %c0_38] : memref<32x32xbf16, #tpu.memory_space<vmem>>, vector<32x32xbf16>
    %cst_39 = arith.constant dense<0.000000e+00> : vector<8x32xf32>
    %77 = tpu.matmul %75, %76, %cst_39 {dimension_numbers = #tpu.dot_dimension_numbers<[1], [0], [0], [1], [0, 0, 1, 1], [], []>} : vector<8x32xbf16>, vector<32x32xbf16>, vector<8x32xf32> -> vector<8x32xf32>
    %78 = arith.addf %1, %77 : vector<8x32xf32>
    %c0_40 = arith.constant 0 : index
    %c0_41 = arith.constant 0 : index
    %c0_42 = arith.constant 0 : index
    %79 = vector.load %arg11[%c0_40, %c0_41, %c0_42] : memref<1x8x32xf32, #tpu.memory_space<vmem>>, vector<1x8x32xf32>
    %80 = vector.shape_cast %79 : vector<1x8x32xf32> to vector<8x32xf32>
    %81 = vector.shape_cast %78 : vector<8x32xf32> to vector<1x8x32xf32>
    tpu.vector_store %arg11[%c0_40, %c0_41, %c0_42], %81 {strides = array<i32>} : memref<1x8x32xf32, #tpu.memory_space<vmem>>, vector<1x8x32xf32>,
    return
  }
  func.func @transform_0(%arg0: i32) -> (i32, i32, i32) {
    %c0_i32 = arith.constant 0 : i32
    %c0_i32_0 = arith.constant 0 : i32
    %c0_i32_1 = arith.constant 0 : i32
    return %arg0, %c0_i32, %c0_i32_0 : i32, i32, i32
  }
  func.func @transform_1(%arg0: i32) -> (i32, i32) {
    %c0_i32 = arith.constant 0 : i32
    %c0_i32_0 = arith.constant 0 : i32
    %c0_i32_1 = arith.constant 0 : i32
    return %c0_i32, %c0_i32_0 : i32, i32
  }
  func.func @transform_2(%arg0: i32) -> (i32, i32) {
    %c0_i32 = arith.constant 0 : i32
    %c0_i32_0 = arith.constant 0 : i32
    %c0_i32_1 = arith.constant 0 : i32
    return %c0_i32, %c0_i32_0 : i32, i32
  }
  func.func @transform_3(%arg0: i32) -> (i32, i32) {
    %c0_i32 = arith.constant 0 : i32
    %c0_i32_0 = arith.constant 0 : i32
    %c0_i32_1 = arith.constant 0 : i32
    return %c0_i32, %c0_i32_0 : i32, i32
  }
  func.func @transform_4(%arg0: i32) -> (i32, i32) {
    %c0_i32 = arith.constant 0 : i32
    %c0_i32_0 = arith.constant 0 : i32
    %c0_i32_1 = arith.constant 0 : i32
    return %c0_i32, %c0_i32_0 : i32, i32
  }
  func.func @transform_5(%arg0: i32) -> (i32, i32) {
    %c0_i32 = arith.constant 0 : i32
    %c0_i32_0 = arith.constant 0 : i32
    %c0_i32_1 = arith.constant 0 : i32
    return %c0_i32, %c0_i32_0 : i32, i32
  }
  func.func @transform_6(%arg0: i32) -> (i32, i32) {
    %c0_i32 = arith.constant 0 : i32
    %c0_i32_0 = arith.constant 0 : i32
    %c0_i32_1 = arith.constant 0 : i32
    return %c0_i32, %c0_i32_0 : i32, i32
  }
  func.func @transform_7(%arg0: i32) -> (i32, i32) {
    %c0_i32 = arith.constant 0 : i32
    %c0_i32_0 = arith.constant 0 : i32
    %c0_i32_1 = arith.constant 0 : i32
    return %c0_i32, %c0_i32_0 : i32, i32
  }
  func.func @transform_8(%arg0: i32) -> (i32, i32) {
    %c0_i32 = arith.constant 0 : i32
    %c0_i32_0 = arith.constant 0 : i32
    %c0_i32_1 = arith.constant 0 : i32
    return %c0_i32, %c0_i32_0 : i32, i32
  }
  func.func @transform_9(%arg0: i32) -> (i32, i32) {
    %c0_i32 = arith.constant 0 : i32
    %c0_i32_0 = arith.constant 0 : i32
    %c0_i32_1 = arith.constant 0 : i32
    return %c0_i32, %c0_i32_0 : i32, i32
  }
  func.func @transform_10(%arg0: i32) -> (i32, i32, i32) {
    %c0_i32 = arith.constant 0 : i32
    %c0_i32_0 = arith.constant 0 : i32
    %c0_i32_1 = arith.constant 0 : i32
    return %arg0, %c0_i32, %c0_i32_0 : i32, i32, i32
  }
}

module attributes {stable_mosaic.version = 11 : i64} {
  func.func @_mlp_branch_kernel(%arg0: i32, %arg1: memref<8x32xf32, #tpu.memory_space<vmem>>, %arg2: memref<1x32xf32, #tpu.memory_space<vmem>>, %arg3: memref<1x32xf32, #tpu.memory_space<vmem>>, %arg4: memref<32x96xbf16, #tpu.memory_space<vmem>>, %arg5: memref<1x96xf32, #tpu.memory_space<vmem>>, %arg6: memref<96x32xbf16, #tpu.memory_space<vmem>>, %arg7: memref<1x32xf32, #tpu.memory_space<vmem>>, %arg8: memref<8x32xf32, #tpu.memory_space<vmem>>) attributes {dimension_semantics = [#tpu.dimension_semantics<parallel>], iteration_bounds = array<i64: 2>, scalar_prefetch = 0 : i64, scratch_operands = 0 : i64, tpu.core_type = #tpu.core_type<tc>, window_params = [{transform_indices = @transform_0, window_bounds = array<i64: 8, 32>}, {pipeline_mode = #tpu.pipeline_mode<synchronous>, transform_indices = @transform_1, window_bounds = array<i64: 1, 32>}, {pipeline_mode = #tpu.pipeline_mode<synchronous>, transform_indices = @transform_2, window_bounds = array<i64: 1, 32>}, {pipeline_mode = #tpu.pipeline_mode<synchronous>, transform_indices = @transform_3, window_bounds = array<i64: 32, 96>}, {pipeline_mode = #tpu.pipeline_mode<synchronous>, transform_indices = @transform_4, window_bounds = array<i64: 1, 96>}, {pipeline_mode = #tpu.pipeline_mode<synchronous>, transform_indices = @transform_5, window_bounds = array<i64: 96, 32>}, {pipeline_mode = #tpu.pipeline_mode<synchronous>, transform_indices = @transform_6, window_bounds = array<i64: 1, 32>}, {transform_indices = @transform_7, window_bounds = array<i64: 8, 32>}]} {
    %c0 = arith.constant 0 : index
    %c0_0 = arith.constant 0 : index
    %0 = vector.load %arg1[%c0, %c0_0] : memref<8x32xf32, #tpu.memory_space<vmem>>, vector<8x32xf32>
    %cst = arith.constant dense<0.000000e+00> : vector<8xf32>
    %1 = vector.multi_reduction <add>, %0, %cst [1] : vector<8x32xf32> to vector<8xf32>
    %2 = vector.shape_cast %1 : vector<8xf32> to vector<8x1xf32>
    %cst_1 = arith.constant 3.200000e+01 : f32
    %3 = vector.broadcast %cst_1 : f32 to vector<8x1xf32>
    %4 = arith.divf %2, %3 : vector<8x1xf32>
    %5 = vector.broadcast %4 : vector<8x1xf32> to vector<8x32xf32>
    %6 = arith.subf %0, %5 : vector<8x32xf32>
    %7 = arith.mulf %6, %6 : vector<8x32xf32>
    %cst_2 = arith.constant dense<0.000000e+00> : vector<8xf32>
    %8 = vector.multi_reduction <add>, %7, %cst_2 [1] : vector<8x32xf32> to vector<8xf32>
    %9 = vector.shape_cast %8 : vector<8xf32> to vector<8x1xf32>
    %cst_3 = arith.constant 3.200000e+01 : f32
    %10 = vector.broadcast %cst_3 : f32 to vector<8x1xf32>
    %11 = arith.divf %9, %10 : vector<8x1xf32>
    %cst_4 = arith.constant 9.99999974E-6 : f32
    %12 = vector.broadcast %cst_4 : f32 to vector<8x1xf32>
    %13 = arith.addf %11, %12 : vector<8x1xf32>
    %14 = math.rsqrt %13 : vector<8x1xf32>
    %15 = vector.broadcast %14 : vector<8x1xf32> to vector<8x32xf32>
    %16 = arith.mulf %6, %15 : vector<8x32xf32>
    %c0_5 = arith.constant 0 : index
    %c0_6 = arith.constant 0 : index
    %17 = vector.load %arg2[%c0_5, %c0_6] : memref<1x32xf32, #tpu.memory_space<vmem>>, vector<1x32xf32>
    %18 = vector.broadcast %17 : vector<1x32xf32> to vector<8x32xf32>
    %19 = arith.mulf %16, %18 : vector<8x32xf32>
    %c0_7 = arith.constant 0 : index
    %c0_8 = arith.constant 0 : index
    %20 = vector.load %arg3[%c0_7, %c0_8] : memref<1x32xf32, #tpu.memory_space<vmem>>, vector<1x32xf32>
    %21 = vector.broadcast %20 : vector<1x32xf32> to vector<8x32xf32>
    %22 = arith.addf %19, %21 : vector<8x32xf32>
    %23 = arith.truncf %22 : vector<8x32xf32> to vector<8x32xbf16>
    %c0_9 = arith.constant 0 : index
    %c0_10 = arith.constant 0 : index
    %24 = vector.load %arg4[%c0_9, %c0_10] : memref<32x96xbf16, #tpu.memory_space<vmem>>, vector<32x96xbf16>
    %cst_11 = arith.constant dense<0.000000e+00> : vector<8x96xf32>
    %25 = tpu.matmul %23, %24, %cst_11 {dimension_numbers = #tpu.dot_dimension_numbers<[1], [0], [0], [1], [0, 0, 1, 1], [], []>} : vector<8x32xbf16>, vector<32x96xbf16>, vector<8x96xf32> -> vector<8x96xf32>
    %c0_12 = arith.constant 0 : index
    %c0_13 = arith.constant 0 : index
    %26 = vector.load %arg5[%c0_12, %c0_13] : memref<1x96xf32, #tpu.memory_space<vmem>>, vector<1x96xf32>
    %27 = vector.broadcast %26 : vector<1x96xf32> to vector<8x96xf32>
    %28 = arith.addf %25, %27 : vector<8x96xf32>
    %cst_14 = arith.constant 0.000000e+00 : f32
    %29 = vector.broadcast %cst_14 : f32 to vector<8x96xf32>
    %30 = arith.subf %29, %28 : vector<8x96xf32>
    %31 = math.exp %30 : vector<8x96xf32>
    %cst_15 = arith.constant 1.000000e+00 : f32
    %32 = vector.broadcast %cst_15 : f32 to vector<8x96xf32>
    %33 = arith.addf %32, %31 : vector<8x96xf32>
    %cst_16 = arith.constant 1.000000e+00 : f32
    %34 = vector.broadcast %cst_16 : f32 to vector<8x96xf32>
    %35 = arith.divf %34, %33 : vector<8x96xf32>
    %36 = arith.mulf %28, %35 : vector<8x96xf32>
    %37 = arith.truncf %36 : vector<8x96xf32> to vector<8x96xbf16>
    %c0_17 = arith.constant 0 : index
    %c0_18 = arith.constant 0 : index
    %38 = vector.load %arg6[%c0_17, %c0_18] : memref<96x32xbf16, #tpu.memory_space<vmem>>, vector<96x32xbf16>
    %cst_19 = arith.constant dense<0.000000e+00> : vector<8x32xf32>
    %39 = tpu.matmul %37, %38, %cst_19 {dimension_numbers = #tpu.dot_dimension_numbers<[1], [0], [0], [1], [0, 0, 1, 1], [], []>} : vector<8x96xbf16>, vector<96x32xbf16>, vector<8x32xf32> -> vector<8x32xf32>
    %c0_20 = arith.constant 0 : index
    %c0_21 = arith.constant 0 : index
    %40 = vector.load %arg7[%c0_20, %c0_21] : memref<1x32xf32, #tpu.memory_space<vmem>>, vector<1x32xf32>
    %41 = vector.broadcast %40 : vector<1x32xf32> to vector<8x32xf32>
    %42 = arith.addf %39, %41 : vector<8x32xf32>
    %43 = arith.addf %0, %42 : vector<8x32xf32>
    %c0_22 = arith.constant 0 : index
    %c0_23 = arith.constant 0 : index
    %44 = vector.load %arg8[%c0_22, %c0_23] : memref<8x32xf32, #tpu.memory_space<vmem>>, vector<8x32xf32>
    tpu.vector_store %arg8[%c0_22, %c0_23], %43 {strides = array<i32>} : memref<8x32xf32, #tpu.memory_space<vmem>>, vector<8x32xf32>,
    return
  }
  func.func @transform_0(%arg0: i32) -> (i32, i32) {
    %c0_i32 = arith.constant 0 : i32
    %c0_i32_0 = arith.constant 0 : i32
    return %arg0, %c0_i32 : i32, i32
  }
  func.func @transform_1(%arg0: i32) -> (i32, i32) {
    %c0_i32 = arith.constant 0 : i32
    %c0_i32_0 = arith.constant 0 : i32
    %c0_i32_1 = arith.constant 0 : i32
    return %c0_i32, %c0_i32_0 : i32, i32
  }
  func.func @transform_2(%arg0: i32) -> (i32, i32) {
    %c0_i32 = arith.constant 0 : i32
    %c0_i32_0 = arith.constant 0 : i32
    %c0_i32_1 = arith.constant 0 : i32
    return %c0_i32, %c0_i32_0 : i32, i32
  }
  func.func @transform_3(%arg0: i32) -> (i32, i32) {
    %c0_i32 = arith.constant 0 : i32
    %c0_i32_0 = arith.constant 0 : i32
    %c0_i32_1 = arith.constant 0 : i32
    return %c0_i32, %c0_i32_0 : i32, i32
  }
  func.func @transform_4(%arg0: i32) -> (i32, i32) {
    %c0_i32 = arith.constant 0 : i32
    %c0_i32_0 = arith.constant 0 : i32
    %c0_i32_1 = arith.constant 0 : i32
    return %c0_i32, %c0_i32_0 : i32, i32
  }
  func.func @transform_5(%arg0: i32) -> (i32, i32) {
    %c0_i32 = arith.constant 0 : i32
    %c0_i32_0 = arith.constant 0 : i32
    %c0_i32_1 = arith.constant 0 : i32
    return %c0_i32, %c0_i32_0 : i32, i32
  }
  func.func @transform_6(%arg0: i32) -> (i32, i32) {
    %c0_i32 = arith.constant 0 : i32
    %c0_i32_0 = arith.constant 0 : i32
    %c0_i32_1 = arith.constant 0 : i32
    return %c0_i32, %c0_i32_0 : i32, i32
  }
  func.func @transform_7(%arg0: i32) -> (i32, i32) {
    %c0_i32 = arith.constant 0 : i32
    %c0_i32_0 = arith.constant 0 : i32
    return %arg0, %c0_i32 : i32, i32
  }
}

</mosaic_0001>

<llo_original>
// kernel: residual_block.3
$region0: #{residual_block.3}
  #allocation0 [shape = 'u32[]', space=smem, size = 0x4, offset = 0x4, fixed_abs, tag = 'smem constant byte address 0x4 - core index']
  #allocation1 [shape = 'u32[144,128]{1,0:T(1,128)}', space=vmem, size = 0x12000, scoped, tag = 'internal scratch']
  %s0 = inlined_call_operand.vmem [shape: f32[16,32], index: 0, kind: input, shape index: {}]
  %s1 = inlined_call_operand.vmem [shape: f32[1,32], index: 1, kind: input, shape index: {}]
  %s2 = inlined_call_operand.vmem [shape: f32[1,32], index: 2, kind: input, shape index: {}]
  %s3 = inlined_call_operand.vmem [shape: bf16[32,96], index: 3, kind: input, shape index: {}]
  %s4 = inlined_call_operand.vmem [shape: f32[1,96], index: 4, kind: input, shape index: {}]
  %s5 = inlined_call_operand.vmem [shape: bf16[96,32], index: 5, kind: input, shape index: {}]
  %s6 = inlined_call_operand.vmem [shape: f32[1,32], index: 6, kind: input, shape index: {}]
  %s7 = inlined_call_operand.hbm [shape: f32[16,32], index: 7, kind: output, shape index: {}]
  %s8 = sld [smem:[#allocation0]]
  $region61: #{residual_block.3} parent=0
    _
  %s10 = ssub.s32 1, %s8
  %s11 = scalar_select 0, %s10, %s8
  $region1: #{residual_block.3} parent=0
    #allocation2 [shape = 'u8[8192]{0}', space=vmem, size = 0x2000, scoped, tag = 'output window, operand 0']
    #allocation3 [shape = 's32[2]{0}', space=sflag, size = 0x8, scoped, tag = 'scoped memory for residual_block.3']
    %12 = vsyncpa [#allocation3], 0
    %s13 = scalar_lea.sflag [#allocation3], 1
    %14 = vsyncpa %s13, 0
    loop: start=0, step=1, limit=4
    $region2: #{residual_block.3} parent=1 // loop_pre_header
      _
    $region3: #{residual_block.3} parent=1 // loop_header
      %s16 = sphi 0, %s20
      %p17 = scmp.ge.s32.totalorder %s16, 4
      %s26 = sphi 0, %s28
      %s29 = sphi 0, %s26
      %s30 = sphi 0, %s29
      %s46 = sphi 0, %s30
      %s50 = sphi 0, %s50
      %s52 = sphi 0, %s50
      %s53 = sphi 0, %s52
      %s67 = sphi 0, %s53
      %s71 = sphi 0, %s71
      %s73 = sphi 0, %s71
      %s74 = sphi 0, %s73
      %s88 = sphi 0, %s74
      %s92 = sphi 0, %s92
      %s94 = sphi 0, %s92
      %s95 = sphi 0, %s94
      %s109 = sphi 0, %s95
      %s113 = sphi 0, %s113
      %s115 = sphi 0, %s113
      %s116 = sphi 0, %s115
      %s130 = sphi 0, %s116
      %s134 = sphi 0, %s134
      %s136 = sphi 0, %s134
      %s137 = sphi 0, %s136
      %s151 = sphi 0, %s137
      %s155 = sphi 0, %s155
      %s157 = sphi 0, %s155
      %s158 = sphi 0, %s157
      %s172 = sphi 0, %s158
      %s178 = sphi 0, %s180
      %s181 = sphi 0, %s178
      %s182 = sphi 0, %s181
      %s198 = sphi 0, %s182
    $region4: #{residual_block.3} parent=1 // loop_header_branch
      %19 = sbr.rel (%p17) target = $region8
    $region5: #{residual_block.3} parent=1 // loop_body
      %s21 = ssub.s32 %s16, 1
      %s22 = ssub.s32 %s16, 2
      %s23 = sadd.s32 %s16, 1
      %s24 = ssub.s32 %s16, %s23
      %p25 = scmp.eq.s32.totalorder %s24, 0
      %s27 = sadd.s32 %s26, 1
      %s28 = scalar_select %p25, %s26, %s27
      %p31 = pneg %p25
      %p32 = scmp.eq.s32.totalorder %s16, 1
      %p33 = por %p31, %p32
      %p34 = scmp.ne.s32.totalorder %s26, %s29
      %p35 = scmp.eq.s32.totalorder %s16, 0
      %p36 = por %p34, %p35
      %p37 = scmp.ne.s32.totalorder %s26, %s29
      %p38 = scmp.eq.s32.totalorder %s21, 1
      %p39 = por %p37, %p38
      %p40 = scmp.ne.s32.totalorder %s29, %s30
      %p41 = scmp.eq.s32.totalorder %s21, 0
      %p42 = por %p40, %p41
      %p43 = scmp.ne.s32.totalorder %s29, %s30
      %p44 = scmp.eq.s32.totalorder %s22, 1
      %p45 = por %p43, %p44
      %p47 = scmp.ne.s32.totalorder %s30, %s46
      %p48 = scmp.eq.s32.totalorder %s22, 0
      %p49 = por %p47, %p48
      %s51 = sadd.s32 %s50, 1
      %p54 = scmp.eq.s32.totalorder %s16, 1
      %p55 = scmp.ne.s32.totalorder %s50, %s52
      %p56 = scmp.eq.s32.totalorder %s16, 0
      %p57 = por %p55, %p56
      %p58 = scmp.ne.s32.totalorder %s50, %s52
      %p59 = scmp.eq.s32.totalorder %s21, 1
      %p60 = por %p58, %p59
      %p61 = scmp.ne.s32.totalorder %s52, %s53
      %p62 = scmp.eq.s32.totalorder %s21, 0
      %p63 = por %p61, %p62
      %p64 = scmp.ne.s32.totalorder %s52, %s53
      %p65 = scmp.eq.s32.totalorder %s22, 1
      %p66 = por %p64, %p65
      %p68 = scmp.ne.s32.totalorder %s53, %s67
      %p69 = scmp.eq.s32.totalorder %s22, 0
      %p70 = por %p68, %p69
      %s72 = sadd.s32 %s71, 1
      %p75 = scmp.eq.s32.totalorder %s16, 1
      %p76 = scmp.ne.s32.totalorder %s71, %s73
      %p77 = scmp.eq.s32.totalorder %s16, 0
      %p78 = por %p76, %p77
      %p79 = scmp.ne.s32.totalorder %s71, %s73
      %p80 = scmp.eq.s32.totalorder %s21, 1
      %p81 = por %p79, %p80
      %p82 = scmp.ne.s32.totalorder %s73, %s74
      %p83 = scmp.eq.s32.totalorder %s21, 0
      %p84 = por %p82, %p83
      %p85 = scmp.ne.s32.totalorder %s73, %s74
      %p86 = scmp.eq.s32.totalorder %s22, 1
      %p87 = por %p85, %p86
      %p89 = scmp.ne.s32.totalorder %s74, %s88
      %p90 = scmp.eq.s32.totalorder %s22, 0
      %p91 = por %p89, %p90
      %s93 = sadd.s32 %s92, 1
      %p96 = scmp.eq.s32.totalorder %s16, 1
      %p97 = scmp.ne.s32.totalorder %s92, %s94
      %p98 = scmp.eq.s32.totalorder %s16, 0
      %p99 = por %p97, %p98
      %p100 = scmp.ne.s32.totalorder %s92, %s94
      %p101 = scmp.eq.s32.totalorder %s21, 1
      %p102 = por %p100, %p101
      %p103 = scmp.ne.s32.totalorder %s94, %s95
      %p104 = scmp.eq.s32.totalorder %s21, 0
      %p105 = por %p103, %p104
      %p106 = scmp.ne.s32.totalorder %s94, %s95
      %p107 = scmp.eq.s32.totalorder %s22, 1
      %p108 = por %p106, %p107
      %p110 = scmp.ne.s32.totalorder %s95, %s109
      %p111 = scmp.eq.s32.totalorder %s22, 0
      %p112 = por %p110, %p111
      %s114 = sadd.s32 %s113, 1
      %p117 = scmp.eq.s32.totalorder %s16, 1
      %p118 = scmp.ne.s32.totalorder %s113, %s115
      %p119 = scmp.eq.s32.totalorder %s16, 0
      %p120 = por %p118, %p119
      %p121 = scmp.ne.s32.totalorder %s113, %s115
      %p122 = scmp.eq.s32.totalorder %s21, 1
      %p123 = por %p121, %p122
      %p124 = scmp.ne.s32.totalorder %s115, %s116
      %p125 = scmp.eq.s32.totalorder %s21, 0
      %p126 = por %p124, %p125
      %p127 = scmp.ne.s32.totalorder %s115, %s116
      %p128 = scmp.eq.s32.totalorder %s22, 1
      %p129 = por %p127, %p128
      %p131 = scmp.ne.s32.totalorder %s116, %s130
      %p132 = scmp.eq.s32.totalorder %s22, 0
      %p133 = por %p131, %p132
      %s135 = sadd.s32 %s134, 1
      %p138 = scmp.eq.s32.totalorder %s16, 1
      %p139 = scmp.ne.s32.totalorder %s134, %s136
      %p140 = scmp.eq.s32.totalorder %s16, 0
      %p141 = por %p139, %p140
      %p142 = scmp.ne.s32.totalorder %s134, %s136
      %p143 = scmp.eq.s32.totalorder %s21, 1
      %p144 = por %p142, %p143
      %p145 = scmp.ne.s32.totalorder %s136, %s137
      %p146 = scmp.eq.s32.totalorder %s21, 0
      %p147 = por %p145, %p146
      %p148 = scmp.ne.s32.totalorder %s136, %s137
      %p149 = scmp.eq.s32.totalorder %s22, 1
      %p150 = por %p148, %p149
      %p152 = scmp.ne.s32.totalorder %s137, %s151
      %p153 = scmp.eq.s32.totalorder %s22, 0
      %p154 = por %p152, %p153
      %s156 = sadd.s32 %s155, 1
      %p159 = scmp.eq.s32.totalorder %s16, 1
      %p160 = scmp.ne.s32.totalorder %s155, %s157
      %p161 = scmp.eq.s32.totalorder %s16, 0
      %p162 = por %p160, %p161
      %p163 = scmp.ne.s32.totalorder %s155, %s157
      %p164 = scmp.eq.s32.totalorder %s21, 1
      %p165 = por %p163, %p164
      %p166 = scmp.ne.s32.totalorder %s157, %s158
      %p167 = scmp.eq.s32.totalorder %s21, 0
      %p168 = por %p166, %p167
      %p169 = scmp.ne.s32.totalorder %s157, %s158
      %p170 = scmp.eq.s32.totalorder %s22, 1
      %p171 = por %p169, %p170
      %p173 = scmp.ne.s32.totalorder %s158, %s172
      %p174 = scmp.eq.s32.totalorder %s22, 0
      %p175 = por %p173, %p174
      %s176 = ssub.s32 %s16, %s23
      %p177 = scmp.eq.s32.totalorder %s176, 0
      %s179 = sadd.s32 %s178, 1
      %s180 = scalar_select %p177, %s178, %s179
      %p183 = pneg %p177
      %p184 = scmp.eq.s32.totalorder %s16, 1
      %p185 = por %p183, %p184
      %p186 = scmp.ne.s32.totalorder %s178, %s181
      %p187 = scmp.eq.s32.totalorder %s16, 0
      %p188 = por %p186, %p187
      %p189 = scmp.ne.s32.totalorder %s178, %s181
      %p190 = scmp.eq.s32.totalorder %s21, 1
      %p191 = por %p189, %p190
      %p192 = scmp.ne.s32.totalorder %s181, %s182
      %p193 = scmp.eq.s32.totalorder %s21, 0
      %p194 = por %p192, %p193
      %p195 = scmp.ne.s32.totalorder %s181, %s182
      %p196 = scmp.eq.s32.totalorder %s22, 1
      %p197 = por %p195, %p196
      %p199 = scmp.ne.s32.totalorder %s182, %s198
      %p200 = scmp.eq.s32.totalorder %s22, 0
      %p201 = por %p199, %p200
      %p202 = scmp.le.s32.totalorder 1, %s16
      %p203 = scmp.lt.s32.totalorder %s16, 3
      %p204 = pnand %p202, %p203
      %p205 = pneg %p204
      // Predicated region
      $region9: #{residual_block.3} parent=5 // pred_check
        _
      $region10: #{residual_block.3} parent=5 // pred_check_branch
        %207 = sbr.rel (%p204) target = $region12
      $region11: #{residual_block.3} parent=5 // pred_region
        %s208 = ssub.s32 %s16, 1
        // Predicated region
        $region13: #{residual_block.3} parent=11 // pred_check
          %p209 = pneg %p63
        $region14: #{residual_block.3} parent=11 // pred_check_branch
          %211 = sbr.rel (%p209) target = $region16
        $region15: #{residual_block.3} parent=11 // pred_region
          _
        $region16: #{residual_block.3} parent=11 // pred_fallthru
          _
        // Predicated region
        $region17: #{residual_block.3} parent=11 // pred_check
          %p212 = pneg %p84
        $region18: #{residual_block.3} parent=11 // pred_check_branch
          %214 = sbr.rel (%p212) target = $region20
        $region19: #{residual_block.3} parent=11 // pred_region
          _
        $region20: #{residual_block.3} parent=11 // pred_fallthru
          _
        // Predicated region
        $region21: #{residual_block.3} parent=11 // pred_check
          %p215 = pneg %p105
        $region22: #{residual_block.3} parent=11 // pred_check_branch
          %217 = sbr.rel (%p215) target = $region24
        $region23: #{residual_block.3} parent=11 // pred_region
          _
        $region24: #{residual_block.3} parent=11 // pred_fallthru
          _
        // Predicated region
        $region25: #{residual_block.3} parent=11 // pred_check
          %p218 = pneg %p126
        $region26: #{residual_block.3} parent=11 // pred_check_branch
          %220 = sbr.rel (%p218) target = $region28
        $region27: #{residual_block.3} parent=11 // pred_region
          _
        $region28: #{residual_block.3} parent=11 // pred_fallthru
          _
        // Predicated region
        $region29: #{residual_block.3} parent=11 // pred_check
          %p221 = pneg %p147
        $region30: #{residual_block.3} parent=11 // pred_check_branch
          %223 = sbr.rel (%p221) target = $region32
        $region31: #{residual_block.3} parent=11 // pred_region
          _
        $region32: #{residual_block.3} parent=11 // pred_fallthru
          _
        // Predicated region
        $region33: #{residual_block.3} parent=11 // pred_check
          %p224 = pneg %p168
        $region34: #{residual_block.3} parent=11 // pred_check_branch
          %226 = sbr.rel (%p224) target = $region36
        $region35: #{residual_block.3} parent=11 // pred_region
          _
        $region36: #{residual_block.3} parent=11 // pred_fallthru
          _
      $region12: #{residual_block.3} parent=5 // pred_fallthru
        _
      %p227 = scmp.lt.s32.totalorder %s16, 2
      // Predicated region
      $region37: #{residual_block.3} parent=5 // pred_check
        %p228 = pneg %p227
      $region38: #{residual_block.3} parent=5 // pred_check_branch
        %230 = sbr.rel (%p228) target = $region40
      $region39: #{residual_block.3} parent=5 // pred_region
        // Predicated region
        $region41: #{residual_block.3} parent=39 // pred_check
          %p231 = pneg %p36
        $region42: #{residual_block.3} parent=39 // pred_check_branch
          %233 = sbr.rel (%p231) target = $region44
        $region43: #{residual_block.3} parent=39 // pred_region
          %p234 = scmp.lt.s32.totalorder %s16, 1
          %s235 = scalar_select %p234, %s16, 1
          %s236 = smul.addr %s235, 8
          %s237 = scalar_lea.vmem %s0, %s236
        $region44: #{residual_block.3} parent=39 // pred_fallthru
          _
      $region40: #{residual_block.3} parent=5 // pred_fallthru
        _
      %p238 = scmp.le.s32.totalorder 1, %s16
      %p239 = scmp.lt.s32.totalorder %s16, 3
      %p240 = pnand %p238, %p239
      %p241 = pneg %p240
      // Predicated region
      $region45: #{residual_block.3} parent=5 // pred_check
        _
      $region46: #{residual_block.3} parent=5 // pred_check_branch
        %243 = sbr.rel (%p240) target = $region48
      $region47: #{residual_block.3} parent=5 // pred_region
        %s244 = ssub.s32 %s16, 1
        %p245 = scmp.lt.s32.totalorder %s21, 1
        %s246 = scalar_select %p245, %s21, 1
        %s247 = smul.addr %s246, 8
        %s248 = scalar_lea.vmem %s0, %s247
        %p249 = pneg %p42
        %p250 = pneg %p39
        %p251 = pneg %p63
        %p252 = pneg %p60
        %p253 = pneg %p84
        %p254 = pneg %p81
        %p255 = pneg %p105
        %p256 = pneg %p102
        %p257 = pneg %p126
        %p258 = pneg %p123
        %p259 = pneg %p147
        %p260 = pneg %p144
        %p261 = pneg %p168
        %p262 = pneg %p165
        %p263 = pneg %p194
        %p264 = pneg %p191
        %s265 = sand.u32 %s181, 1
        %s266 = scalar_lea.sflag [#allocation3], %s265
        %s267 = sand.u32 %s181, 1
        %s268 = smul.addr %s267, 8
        %s269 = scalar_lea.vmem [#allocation2], %s268
        %p270 = scmp.lt.s32.totalorder %s21, 1
        %s271 = scalar_select %p270, %s21, 1
        %s272 = smul.addr %s271, 8
        %s273 = scalar_lea.vmem %s0, %s272
        %v275 = vld [vmem:[%s273] sm:$0xff]
        %vm276 = vcmask 261120
        %v277 = vsel %vm276, %v275, 0.0
        %278 = vadd.xlane.f32.xlu0 %v277
        %v279 = vpop.xlane.xlu0 %278
        %v280 = vrcp.pop 32.0
        %v281 = vmul.f32 %v279, %v280
        %v282 = vsub.f32 %v275, %v281
        %v283 = vmul.f32 %v282, %v282
        %v284 = vsel %vm276, %v283, 0.0
        %285 = vadd.xlane.f32.xlu0 %v284
        %v286 = vpop.xlane.xlu0 %285
        %v287 = vmul.f32 %v286, %v280
        %v288 = vadd.f32 %v287, 1e-05
        %v289 = vrsqrt.pop %v288
        %v290 = vmul.f32 %v282, %v289
        %v291 = vld [vmem:[%s1] sm:$0x1]
        %v293 = vlaneseq
        %v294 = vshrl.u32 %v293, 7
        %v295 = vsub.s32 0, %v294
        %v296 = vrot.slane %v291, %v295
        %v298 = vmul.f32 %v290, %v296
        %v299 = vld [vmem:[%s2] sm:$0x1]
        %v301 = vlaneseq
        %v302 = vshrl.u32 %v301, 7
        %v303 = vsub.s32 0, %v302
        %v304 = vrot.slane %v299, %v303
        %v306 = vadd.f32 %v298, %v304
        %v307 = vpack.c.bf16 %v306, %v306
        %v308 = vld [vmem:[%s3] sm:$0xf]
        %v309 = vld [vmem:[%s3 + $0x4] sm:$0xf]
        %v310 = vld [vmem:[%s3 + $0x8] sm:$0xf]
        %v311 = vld [vmem:[%s3 + $0xc] sm:$0xf]
        %v312 = vld [vmem:[%s4] sm:$0x1]
        %v314 = vlaneseq
        %v315 = vshrl.u32 %v314, 7
        %v316 = vsub.s32 0, %v315
        %v317 = vrot.slane %v312, %v316
        %v323 = vunpack.c.l.b16 %v308
        %v324 = vunpack.c.l.b16 %v309
        %v325 = vunpack.c.l.b16 %v310
        %v326 = vunpack.c.l.b16 %v311
        %v327 = vpack.c.b16 %v324, %v323
        %v328 = vpack.c.b16 %v326, %v325
        %v332 = vsel %vm276, %v307, 0
        %334 = vmatprep.subr.bf16.mxu0 0
        %335 = vmatpush1.bf16.msra.mxu0 %v327
        %336 = vmatprep.subr.bf16.mxu0 0
        %337 = vmatpush1.bf16.msra.mxu0 %v328
        %338 = vmatprep.subr.bf16.mxu0 0
        %339 = vmatpush1.bf16.msra.mxu0 0
        %340 = vmatprep.subr.bf16.mxu0 0
        %341 = vmatpush1.bf16.msra.mxu0 0
        %342 = vmatprep.subr.bf16.mxu0 0
        %343 = vmatpush1.bf16.msra.mxu0 0
        %344 = vmatprep.subr.bf16.mxu0 0
        %345 = vmatpush1.bf16.msra.mxu0 0
        %346 = vmatprep.subr.bf16.mxu0 0
        %347 = vmatpush1.bf16.msra.mxu0 0
        %348 = vmatprep.subr.bf16.mxu0 0
        %349 = vmatpush1.bf16.msra.mxu0 0
        %350 = vmatprep.subr.bf16.mxu0 0
        %351 = vmatpush1.bf16.msra.mxu0 0
        %352 = vmatprep.subr.bf16.mxu0 0
        %353 = vmatpush1.bf16.msra.mxu0 0
        %354 = vmatprep.subr.bf16.mxu0 0
        %355 = vmatpush1.bf16.msra.mxu0 0
        %356 = vmatprep.subr.bf16.mxu0 0
        %357 = vmatpush1.bf16.msra.mxu0 0
        %358 = vmatprep.subr.bf16.mxu0 0
        %359 = vmatpush1.bf16.msra.mxu0 0
        %360 = vmatprep.subr.bf16.mxu0 0
        %361 = vmatpush1.bf16.msra.mxu0 0
        %362 = vmatprep.subr.bf16.mxu0 0
        %363 = vmatpush1.bf16.msra.mxu0 0
        %364 = vmatprep.subr.bf16.mxu0 0
        %365 = vmatpush1.bf16.msra.mxu0 0
        %366 = vmatprep.mubr.bf16.mxu0 0
        %367 = vmatmul.mubr.bf16.gmra.mrb[0].mxu0 %v332
        %v368 = vpop.f32.mrb[0].mxu0
        %v369 = vadd.f32 %v317, %v368
        %v370 = vpop.f32.mrb[0].mxu0
        %v371 = vpop.f32.mrb[0].mxu0
        %v372 = vpop.f32.mrb[0].mxu0
        %373 = vdwg.mxu0
        %v374 = vsub.f32 0.0, %v369
        %v375 = vmul.f32 %v374, 1.442695
        %v376 = vpow.pop %v375
        %v377 = vadd.f32 %v376, 1.0
        %v378 = vrcp.pop %v377
        %v379 = vmul.f32 1.0, %v378
        %v380 = vmul.f32 %v369, %v379
        %v381 = vpack.c.bf16 %v380, %v380
        %v382 = vld [vmem:[%s5] sm:$0xf]
        %v383 = vld [vmem:[%s5 + $0x4] sm:$0xf]
        %v384 = vld [vmem:[%s5 + $0x8] sm:$0xf]
        %v385 = vld [vmem:[%s5 + $0xc] sm:$0xf]
        %v386 = vld [vmem:[%s5 + $0x10] sm:$0xf]
        %v387 = vld [vmem:[%s5 + $0x14] sm:$0xf]
        %v388 = vld [vmem:[%s5 + $0x18] sm:$0xf]
        %v389 = vld [vmem:[%s5 + $0x1c] sm:$0xf]
        %v390 = vld [vmem:[%s5 + $0x20] sm:$0xf]
        %v391 = vld [vmem:[%s5 + $0x24] sm:$0xf]
        %v392 = vld [vmem:[%s5 + $0x28] sm:$0xf]
        %v393 = vld [vmem:[%s5 + $0x2c] sm:$0xf]
        %v394 = vld [vmem:[%s6] sm:$0x1]
        %v396 = vlaneseq
        %v397 = vshrl.u32 %v396, 7
        %v398 = vsub.s32 0, %v397
        %v399 = vrot.slane %v394, %v398
        %v413 = vunpack.c.l.b16 %v382
        %v414 = vunpack.c.l.b16 %v383
        %v415 = vunpack.c.l.b16 %v384
        %v416 = vunpack.c.l.b16 %v385
        %v417 = vunpack.c.l.b16 %v386
        %v418 = vunpack.c.l.b16 %v387
        %v419 = vunpack.c.l.b16 %v388
        %v420 = vunpack.c.l.b16 %v389
        %v421 = vunpack.c.l.b16 %v390
        %v422 = vunpack.c.l.b16 %v391
        %v423 = vunpack.c.l.b16 %v392
        %v424 = vunpack.c.l.b16 %v393
        %v425 = vpack.c.b16 %v414, %v413
        %v426 = vpack.c.b16 %v416, %v415
        %v427 = vpack.c.b16 %v418, %v417
        %v428 = vpack.c.b16 %v420, %v419
        %v429 = vpack.c.b16 %v422, %v421
        %v430 = vpack.c.b16 %v424, %v423
        %vm437 = vcmask 785408
        %v439 = vsel %vm437, %v381, 0
        %441 = vmatprep.subr.bf16.mxu0 0
        %442 = vmatpush1.bf16.msra.mxu0 %v425
        %443 = vmatprep.subr.bf16.mxu0 0
        %444 = vmatpush1.bf16.msra.mxu0 %v426
        %445 = vmatprep.subr.bf16.mxu0 0
        %446 = vmatpush1.bf16.msra.mxu0 %v427
        %447 = vmatprep.subr.bf16.mxu0 0
        %448 = vmatpush1.bf16.msra.mxu0 %v428
        %449 = vmatprep.subr.bf16.mxu0 0
        %450 = vmatpush1.bf16.msra.mxu0 %v429
        %451 = vmatprep.subr.bf16.mxu0 0
        %452 = vmatpush1.bf16.msra.mxu0 %v430
        %453 = vmatprep.subr.bf16.mxu0 0
        %454 = vmatpush1.bf16.msra.mxu0 0
        %455 = vmatprep.subr.bf16.mxu0 0
        %456 = vmatpush1.bf16.msra.mxu0 0
        %457 = vmatprep.subr.bf16.mxu0 0
        %458 = vmatpush1.bf16.msra.mxu0 0
        %459 = vmatprep.subr.bf16.mxu0 0
        %460 = vmatpush1.bf16.msra.mxu0 0
        %461 = vmatprep.subr.bf16.mxu0 0
        %462 = vmatpush1.bf16.msra.mxu0 0
        %463 = vmatprep.subr.bf16.mxu0 0
        %464 = vmatpush1.bf16.msra.mxu0 0
        %465 = vmatprep.subr.bf16.mxu0 0
        %466 = vmatpush1.bf16.msra.mxu0 0
        %467 = vmatprep.subr.bf16.mxu0 0
        %468 = vmatpush1.bf16.msra.mxu0 0
        %469 = vmatprep.subr.bf16.mxu0 0
        %470 = vmatpush1.bf16.msra.mxu0 0
        %471 = vmatprep.subr.bf16.mxu0 0
        %472 = vmatpush1.bf16.msra.mxu0 0
        %473 = vmatprep.mubr.bf16.mxu0 0
        %474 = vmatmul.mubr.bf16.gmra.mrb[0].mxu0 %v439
        %v475 = vpop.f32.mrb[0].mxu0
        %v476 = vadd.f32 %v399, %v475
        %v477 = vpop.f32.mrb[0].mxu0
        %v478 = vpop.f32.mrb[0].mxu0
        %v479 = vpop.f32.mrb[0].mxu0
        %480 = vdwg.mxu0
        %v481 = vadd.f32 %v275, %v476
        %482 = vst.msk [vmem:[%s269] sm:$0xff] %vm276, %v481
        %s483 = sand.u32 %s181, 1
        %s484 = scalar_lea.sflag [#allocation3], %s483
        %s485 = sand.u32 %s181, 1
        %s486 = smul.addr %s485, 8
        %s487 = scalar_lea.vmem [#allocation2], %s486
        // Predicated region
        $region49: #{residual_block.3} parent=47 // pred_check
          %p488 = pneg %p191
        $region50: #{residual_block.3} parent=47 // pred_check_branch
          %490 = sbr.rel (%p488) target = $region52
        $region51: #{residual_block.3} parent=47 // pred_region
          %s492 = ssub.s32 128, 128
          %493 = vsyncadd %s484, %s492
          %s494 = smul.addr %s21, 128
          %s495 = scalar_lea.hbm %s7, %s494
          %s497 = sshll.u32 %s487, 4
          %s498 = int_to_ptr.vmem [resolvable:$true] %s497
          %500 = dma.vmem_to_hbm [thread:$0]  %s498, 128, %s495, %s484
        $region52: #{residual_block.3} parent=47 // pred_fallthru
          _
      $region48: #{residual_block.3} parent=5 // pred_fallthru
        _
      %p501 = scmp.le.s32.totalorder 2, %s16
      // Predicated region
      $region53: #{residual_block.3} parent=5 // pred_check
        %p502 = pneg %p501
      $region54: #{residual_block.3} parent=5 // pred_check_branch
        %504 = sbr.rel (%p502) target = $region56
      $region55: #{residual_block.3} parent=5 // pred_region
        %s505 = ssub.s32 %s16, 2
        // Predicated region
        $region57: #{residual_block.3} parent=55 // pred_check
          %p506 = pneg %p197
        $region58: #{residual_block.3} parent=55 // pred_check_branch
          %508 = sbr.rel (%p506) target = $region60
        $region59: #{residual_block.3} parent=55 // pred_region
          %s509 = sand.u32 %s182, 1
          %s510 = scalar_lea.sflag [#allocation3], %s509
          %s511 = sand.u32 %s182, 1
          %s512 = smul.addr %s511, 8
          %s513 = scalar_lea.vmem [#allocation2], %s512
          %514 = dma.done %s510, 128
        $region60: #{residual_block.3} parent=55 // pred_fallthru
          _
      $region56: #{residual_block.3} parent=5 // pred_fallthru
        _
    $region6: #{residual_block.3} parent=1 // loop_footer
      %s20 = sadd.s32 1, %s16
    $region7: #{residual_block.3} parent=1 // loop_footer_branch
      %15 = sbr.rel target = $region3
    $region8: #{residual_block.3} parent=1 // loop_exit
      _
    %515 = vsyncpa [#allocation3], 1
    %s516 = scalar_lea.sflag [#allocation3], 1
    %517 = vsyncpa %s516, 1

// kernel: residual_block.2
$region0: #{residual_block.2}
  #allocation0 [shape = 'u32[]', space=smem, size = 0x4, offset = 0x4, fixed_abs, tag = 'smem constant byte address 0x4 - core index']
  #allocation1 [shape = 'u32[144,128]{1,0:T(1,128)}', space=vmem, size = 0x12000, scoped, tag = 'internal scratch']
  %s0 = inlined_call_operand.hbm [shape: f32[2,8,32], index: 0, kind: input, shape index: {}]
  %s1 = inlined_call_operand.vmem [shape: f32[1,32], index: 1, kind: input, shape index: {}]
  %s2 = inlined_call_operand.vmem [shape: f32[1,32], index: 2, kind: input, shape index: {}]
  %s3 = inlined_call_operand.vmem [shape: bf16[32,32], index: 3, kind: input, shape index: {}]
  %s4 = inlined_call_operand.hbm [shape: bf16[32,32], index: 4, kind: input, shape index: {}]
  %s5 = inlined_call_operand.vmem [shape: bf16[32,32], index: 5, kind: input, shape index: {}]
  %s6 = inlined_call_operand.hbm [shape: bf16[32,32], index: 6, kind: input, shape index: {}]
  %s7 = inlined_call_operand.hbm [shape: f32[8,32], index: 7, kind: input, shape index: {}]
  %s8 = inlined_call_operand.hbm [shape: f32[8,32], index: 8, kind: input, shape index: {}]
  %s9 = inlined_call_operand.hbm [shape: f32[32,32], index: 9, kind: input, shape index: {}]
  %s10 = inlined_call_operand.vmem [shape: f32[2,8,32], index: 10, kind: output, shape index: {}]
  %s11 = sld [smem:[#allocation0]]
  $region97: #{residual_block.2} parent=0
    _
  %s13 = ssub.s32 1, %s11
  %s14 = scalar_select 0, %s13, %s11
  $region1: #{residual_block.2} parent=0
    #allocation2 [shape = 'u8[8192]{0}', space=vmem, size = 0x2000, scoped, tag = 'input window, operand 0']
    #allocation3 [shape = 's32[2]{0}', space=sflag, size = 0x8, scoped, tag = 'scoped memory for residual_block.2']
    #allocation4 [shape = 'u8[8192]{0}', space=vmem, size = 0x2000, scoped, tag = 'input window, operand 4, single buffered']
    #allocation5 [shape = 's32[1]{0}', space=sflag, size = 0x4, scoped, tag = 'scoped memory for residual_block.2']
    #allocation6 [shape = 'u8[8192]{0}', space=vmem, size = 0x2000, scoped, tag = 'input window, operand 6, single buffered']
    #allocation7 [shape = 'u8[4096]{0}', space=vmem, size = 0x1000, scoped, tag = 'input window, operand 7, single buffered']
    #allocation8 [shape = 's32[1]{0}', space=sflag, size = 0x4, scoped, tag = 'scoped memory for residual_block.2']
    #allocation9 [shape = 'u8[4096]{0}', space=vmem, size = 0x1000, scoped, tag = 'input window, operand 8, single buffered']
    #allocation10 [shape = 'u8[16384]{0}', space=vmem, size = 0x4000, scoped, tag = 'input window, operand 9, single buffered']
    #allocation11 [shape = 's32[1]{0}', space=sflag, size = 0x4, scoped, tag = 'scoped memory for residual_block.2']
    %15 = vsyncpa [#allocation3], 0
    %s16 = scalar_lea.sflag [#allocation3], 1
    %17 = vsyncpa %s16, 0
    %18 = vsyncpa [#allocation5], 0
    %19 = vsyncpa [#allocation8], 0
    %20 = vsyncpa [#allocation11], 0
    loop: start=0, step=1, limit=4
    $region2: #{residual_block.2} parent=1 // loop_pre_header
      _
    $region3: #{residual_block.2} parent=1 // loop_header
      %s22 = sphi 0, %s26
      %p23 = scmp.ge.s32.totalorder %s22, 4
      %s32 = sphi 0, %s34
      %s35 = sphi 0, %s32
      %s36 = sphi 0, %s35
      %s52 = sphi 0, %s36
      %s56 = sphi 0, %s56
      %s58 = sphi 0, %s56
      %s59 = sphi 0, %s58
      %s73 = sphi 0, %s59
      %s77 = sphi 0, %s77
      %s79 = sphi 0, %s77
      %s80 = sphi 0, %s79
      %s94 = sphi 0, %s80
      %s98 = sphi 0, %s98
      %s100 = sphi 0, %s98
      %s101 = sphi 0, %s100
      %s115 = sphi 0, %s101
      %s119 = sphi 0, %s119
      %s121 = sphi 0, %s119
      %s122 = sphi 0, %s121
      %s136 = sphi 0, %s122
      %s140 = sphi 0, %s140
      %s142 = sphi 0, %s140
      %s143 = sphi 0, %s142
      %s157 = sphi 0, %s143
      %s161 = sphi 0, %s161
      %s163 = sphi 0, %s161
      %s164 = sphi 0, %s163
      %s178 = sphi 0, %s164
      %s182 = sphi 0, %s182
      %s184 = sphi 0, %s182
      %s185 = sphi 0, %s184
      %s199 = sphi 0, %s185
      %s203 = sphi 0, %s203
      %s205 = sphi 0, %s203
      %s206 = sphi 0, %s205
      %s220 = sphi 0, %s206
      %s224 = sphi 0, %s224
      %s226 = sphi 0, %s224
      %s227 = sphi 0, %s226
      %s241 = sphi 0, %s227
      %s247 = sphi 0, %s249
      %s250 = sphi 0, %s247
      %s251 = sphi 0, %s250
      %s267 = sphi 0, %s251
    $region4: #{residual_block.2} parent=1 // loop_header_branch
      %25 = sbr.rel (%p23) target = $region8
    $region5: #{residual_block.2} parent=1 // loop_body
      %s27 = ssub.s32 %s22, 1
      %s28 = ssub.s32 %s22, 2
      %s29 = sadd.s32 %s22, 1
      %s30 = ssub.s32 %s22, %s29
      %p31 = scmp.eq.s32.totalorder %s30, 0
      %s33 = sadd.s32 %s32, 1
      %s34 = scalar_select %p31, %s32, %s33
      %p37 = pneg %p31
      %p38 = scmp.eq.s32.totalorder %s22, 1
      %p39 = por %p37, %p38
      %p40 = scmp.ne.s32.totalorder %s32, %s35
      %p41 = scmp.eq.s32.totalorder %s22, 0
      %p42 = por %p40, %p41
      %p43 = scmp.ne.s32.totalorder %s32, %s35
      %p44 = scmp.eq.s32.totalorder %s27, 1
      %p45 = por %p43, %p44
      %p46 = scmp.ne.s32.totalorder %s35, %s36
      %p47 = scmp.eq.s32.totalorder %s27, 0
      %p48 = por %p46, %p47
      %p49 = scmp.ne.s32.totalorder %s35, %s36
      %p50 = scmp.eq.s32.totalorder %s28, 1
      %p51 = por %p49, %p50
      %p53 = scmp.ne.s32.totalorder %s36, %s52
      %p54 = scmp.eq.s32.totalorder %s28, 0
      %p55 = por %p53, %p54
      %s57 = sadd.s32 %s56, 1
      %p60 = scmp.eq.s32.totalorder %s22, 1
      %p61 = scmp.ne.s32.totalorder %s56, %s58
      %p62 = scmp.eq.s32.totalorder %s22, 0
      %p63 = por %p61, %p62
      %p64 = scmp.ne.s32.totalorder %s56, %s58
      %p65 = scmp.eq.s32.totalorder %s27, 1
      %p66 = por %p64, %p65
      %p67 = scmp.ne.s32.totalorder %s58, %s59
      %p68 = scmp.eq.s32.totalorder %s27, 0
      %p69 = por %p67, %p68
      %p70 = scmp.ne.s32.totalorder %s58, %s59
      %p71 = scmp.eq.s32.totalorder %s28, 1
      %p72 = por %p70, %p71
      %p74 = scmp.ne.s32.totalorder %s59, %s73
      %p75 = scmp.eq.s32.totalorder %s28, 0
      %p76 = por %p74, %p75
      %s78 = sadd.s32 %s77, 1
      %p81 = scmp.eq.s32.totalorder %s22, 1
      %p82 = scmp.ne.s32.totalorder %s77, %s79
      %p83 = scmp.eq.s32.totalorder %s22, 0
      %p84 = por %p82, %p83
      %p85 = scmp.ne.s32.totalorder %s77, %s79
      %p86 = scmp.eq.s32.totalorder %s27, 1
      %p87 = por %p85, %p86
      %p88 = scmp.ne.s32.totalorder %s79, %s80
      %p89 = scmp.eq.s32.totalorder %s27, 0
      %p90 = por %p88, %p89
      %p91 = scmp.ne.s32.totalorder %s79, %s80
      %p92 = scmp.eq.s32.totalorder %s28, 1
      %p93 = por %p91, %p92
      %p95 = scmp.ne.s32.totalorder %s80, %s94
      %p96 = scmp.eq.s32.totalorder %s28, 0
      %p97 = por %p95, %p96
      %s99 = sadd.s32 %s98, 1
      %p102 = scmp.eq.s32.totalorder %s22, 1
      %p103 = scmp.ne.s32.totalorder %s98, %s100
      %p104 = scmp.eq.s32.totalorder %s22, 0
      %p105 = por %p103, %p104
      %p106 = scmp.ne.s32.totalorder %s98, %s100
      %p107 = scmp.eq.s32.totalorder %s27, 1
      %p108 = por %p106, %p107
      %p109 = scmp.ne.s32.totalorder %s100, %s101
      %p110 = scmp.eq.s32.totalorder %s27, 0
      %p111 = por %p109, %p110
      %p112 = scmp.ne.s32.totalorder %s100, %s101
      %p113 = scmp.eq.s32.totalorder %s28, 1
      %p114 = por %p112, %p113
      %p116 = scmp.ne.s32.totalorder %s101, %s115
      %p117 = scmp.eq.s32.totalorder %s28, 0
      %p118 = por %p116, %p117
      %s120 = sadd.s32 %s119, 1
      %p123 = scmp.eq.s32.totalorder %s22, 1
      %p124 = scmp.ne.s32.totalorder %s119, %s121
      %p125 = scmp.eq.s32.totalorder %s22, 0
      %p126 = por %p124, %p125
      %p127 = scmp.ne.s32.totalorder %s119, %s121
      %p128 = scmp.eq.s32.totalorder %s27, 1
      %p129 = por %p127, %p128
      %p130 = scmp.ne.s32.totalorder %s121, %s122
      %p131 = scmp.eq.s32.totalorder %s27, 0
      %p132 = por %p130, %p131
      %p133 = scmp.ne.s32.totalorder %s121, %s122
      %p134 = scmp.eq.s32.totalorder %s28, 1
      %p135 = por %p133, %p134
      %p137 = scmp.ne.s32.totalorder %s122, %s136
      %p138 = scmp.eq.s32.totalorder %s28, 0
      %p139 = por %p137, %p138
      %s141 = sadd.s32 %s140, 1
      %p144 = scmp.eq.s32.totalorder %s22, 1
      %p145 = scmp.ne.s32.totalorder %s140, %s142
      %p146 = scmp.eq.s32.totalorder %s22, 0
      %p147 = por %p145, %p146
      %p148 = scmp.ne.s32.totalorder %s140, %s142
      %p149 = scmp.eq.s32.totalorder %s27, 1
      %p150 = por %p148, %p149
      %p151 = scmp.ne.s32.totalorder %s142, %s143
      %p152 = scmp.eq.s32.totalorder %s27, 0
      %p153 = por %p151, %p152
      %p154 = scmp.ne.s32.totalorder %s142, %s143
      %p155 = scmp.eq.s32.totalorder %s28, 1
      %p156 = por %p154, %p155
      %p158 = scmp.ne.s32.totalorder %s143, %s157
      %p159 = scmp.eq.s32.totalorder %s28, 0
      %p160 = por %p158, %p159
      %s162 = sadd.s32 %s161, 1
      %p165 = scmp.eq.s32.totalorder %s22, 1
      %p166 = scmp.ne.s32.totalorder %s161, %s163
      %p167 = scmp.eq.s32.totalorder %s22, 0
      %p168 = por %p166, %p167
      %p169 = scmp.ne.s32.totalorder %s161, %s163
      %p170 = scmp.eq.s32.totalorder %s27, 1
      %p171 = por %p169, %p170
      %p172 = scmp.ne.s32.totalorder %s163, %s164
      %p173 = scmp.eq.s32.totalorder %s27, 0
      %p174 = por %p172, %p173
      %p175 = scmp.ne.s32.totalorder %s163, %s164
      %p176 = scmp.eq.s32.totalorder %s28, 1
      %p177 = por %p175, %p176
      %p179 = scmp.ne.s32.totalorder %s164, %s178
      %p180 = scmp.eq.s32.totalorder %s28, 0
      %p181 = por %p179, %p180
      %s183 = sadd.s32 %s182, 1
      %p186 = scmp.eq.s32.totalorder %s22, 1
      %p187 = scmp.ne.s32.totalorder %s182, %s184
      %p188 = scmp.eq.s32.totalorder %s22, 0
      %p189 = por %p187, %p188
      %p190 = scmp.ne.s32.totalorder %s182, %s184
      %p191 = scmp.eq.s32.totalorder %s27, 1
      %p192 = por %p190, %p191
      %p193 = scmp.ne.s32.totalorder %s184, %s185
      %p194 = scmp.eq.s32.totalorder %s27, 0
      %p195 = por %p193, %p194
      %p196 = scmp.ne.s32.totalorder %s184, %s185
      %p197 = scmp.eq.s32.totalorder %s28, 1
      %p198 = por %p196, %p197
      %p200 = scmp.ne.s32.totalorder %s185, %s199
      %p201 = scmp.eq.s32.totalorder %s28, 0
      %p202 = por %p200, %p201
      %s204 = sadd.s32 %s203, 1
      %p207 = scmp.eq.s32.totalorder %s22, 1
      %p208 = scmp.ne.s32.totalorder %s203, %s205
      %p209 = scmp.eq.s32.totalorder %s22, 0
      %p210 = por %p208, %p209
      %p211 = scmp.ne.s32.totalorder %s203, %s205
      %p212 = scmp.eq.s32.totalorder %s27, 1
      %p213 = por %p211, %p212
      %p214 = scmp.ne.s32.totalorder %s205, %s206
      %p215 = scmp.eq.s32.totalorder %s27, 0
      %p216 = por %p214, %p215
      %p217 = scmp.ne.s32.totalorder %s205, %s206
      %p218 = scmp.eq.s32.totalorder %s28, 1
      %p219 = por %p217, %p218
      %p221 = scmp.ne.s32.totalorder %s206, %s220
      %p222 = scmp.eq.s32.totalorder %s28, 0
      %p223 = por %p221, %p222
      %s225 = sadd.s32 %s224, 1
      %p228 = scmp.eq.s32.totalorder %s22, 1
      %p229 = scmp.ne.s32.totalorder %s224, %s226
      %p230 = scmp.eq.s32.totalorder %s22, 0
      %p231 = por %p229, %p230
      %p232 = scmp.ne.s32.totalorder %s224, %s226
      %p233 = scmp.eq.s32.totalorder %s27, 1
      %p234 = por %p232, %p233
      %p235 = scmp.ne.s32.totalorder %s226, %s227
      %p236 = scmp.eq.s32.totalorder %s27, 0
      %p237 = por %p235, %p236
      %p238 = scmp.ne.s32.totalorder %s226, %s227
      %p239 = scmp.eq.s32.totalorder %s28, 1
      %p240 = por %p238, %p239
      %p242 = scmp.ne.s32.totalorder %s227, %s241
      %p243 = scmp.eq.s32.totalorder %s28, 0
      %p244 = por %p242, %p243
      %s245 = ssub.s32 %s22, %s29
      %p246 = scmp.eq.s32.totalorder %s245, 0
      %s248 = sadd.s32 %s247, 1
      %s249 = scalar_select %p246, %s247, %s248
      %p252 = pneg %p246
      %p253 = scmp.eq.s32.totalorder %s22, 1
      %p254 = por %p252, %p253
      %p255 = scmp.ne.s32.totalorder %s247, %s250
      %p256 = scmp.eq.s32.totalorder %s22, 0
      %p257 = por %p255, %p256
      %p258 = scmp.ne.s32.totalorder %s247, %s250
      %p259 = scmp.eq.s32.totalorder %s27, 1
      %p260 = por %p258, %p259
      %p261 = scmp.ne.s32.totalorder %s250, %s251
      %p262 = scmp.eq.s32.totalorder %s27, 0
      %p263 = por %p261, %p262
      %p264 = scmp.ne.s32.totalorder %s250, %s251
      %p265 = scmp.eq.s32.totalorder %s28, 1
      %p266 = por %p264, %p265
      %p268 = scmp.ne.s32.totalorder %s251, %s267
      %p269 = scmp.eq.s32.totalorder %s28, 0
      %p270 = por %p268, %p269
      %p271 = scmp.le.s32.totalorder 1, %s22
      %p272 = scmp.lt.s32.totalorder %s22, 3
      %p273 = pnand %p271, %p272
      %p274 = pneg %p273
      // Predicated region
      $region9: #{residual_block.2} parent=5 // pred_check
        _
      $region10: #{residual_block.2} parent=5 // pred_check_branch
        %276 = sbr.rel (%p273) target = $region12
      $region11: #{residual_block.2} parent=5 // pred_region
        %s277 = ssub.s32 %s22, 1
        // Predicated region
        $region13: #{residual_block.2} parent=11 // pred_check
          %p278 = pneg %p69
        $region14: #{residual_block.2} parent=11 // pred_check_branch
          %280 = sbr.rel (%p278) target = $region16
        $region15: #{residual_block.2} parent=11 // pred_region
          _
        $region16: #{residual_block.2} parent=11 // pred_fallthru
          _
        // Predicated region
        $region17: #{residual_block.2} parent=11 // pred_check
          %p281 = pneg %p90
        $region18: #{residual_block.2} parent=11 // pred_check_branch
          %283 = sbr.rel (%p281) target = $region20
        $region19: #{residual_block.2} parent=11 // pred_region
          _
        $region20: #{residual_block.2} parent=11 // pred_fallthru
          _
        // Predicated region
        $region21: #{residual_block.2} parent=11 // pred_check
          %p284 = pneg %p111
        $region22: #{residual_block.2} parent=11 // pred_check_branch
          %286 = sbr.rel (%p284) target = $region24
        $region23: #{residual_block.2} parent=11 // pred_region
          _
        $region24: #{residual_block.2} parent=11 // pred_fallthru
          _
        // Predicated region
        $region25: #{residual_block.2} parent=11 // pred_check
          %p287 = pneg %p132
        $region26: #{residual_block.2} parent=11 // pred_check_branch
          %289 = sbr.rel (%p287) target = $region28
        $region27: #{residual_block.2} parent=11 // pred_region
          %s291 = ssub.s32 256, 256
          %292 = vsyncadd [#allocation5], %s291
          %s293 = sshll.u32 [#allocation4], 4
          %s294 = int_to_ptr.vmem [resolvable:$true] %s293
          %299 = dma.hbm_to_vmem [thread:$0]  %s4, 256, %s294, [#allocation5], 64, 64, 4
        $region28: #{residual_block.2} parent=11 // pred_fallthru
          _
        // Predicated region
        $region29: #{residual_block.2} parent=11 // pred_check
          %p300 = pneg %p153
        $region30: #{residual_block.2} parent=11 // pred_check_branch
          %302 = sbr.rel (%p300) target = $region32
        $region31: #{residual_block.2} parent=11 // pred_region
          _
        $region32: #{residual_block.2} parent=11 // pred_fallthru
          _
        // Predicated region
        $region33: #{residual_block.2} parent=11 // pred_check
          %p303 = pneg %p174
        $region34: #{residual_block.2} parent=11 // pred_check_branch
          %305 = sbr.rel (%p303) target = $region36
        $region35: #{residual_block.2} parent=11 // pred_region
          %s307 = ssub.s32 256, 256
          %308 = vsyncadd [#allocation5], %s307
          %s309 = sshll.u32 [#allocation6], 4
          %s310 = int_to_ptr.vmem [resolvable:$true] %s309
          %315 = dma.hbm_to_vmem [thread:$0]  %s6, 256, %s310, [#allocation5], 64, 64, 4
        $region36: #{residual_block.2} parent=11 // pred_fallthru
          _
        // Predicated region
        $region37: #{residual_block.2} parent=11 // pred_check
          %p316 = pneg %p195
        $region38: #{residual_block.2} parent=11 // pred_check_branch
          %318 = sbr.rel (%p316) target = $region40
        $region39: #{residual_block.2} parent=11 // pred_region
          %s320 = ssub.s32 128, 128
          %321 = vsyncadd [#allocation8], %s320
          %s323 = sshll.u32 [#allocation7], 4
          %s324 = int_to_ptr.vmem [resolvable:$true] %s323
          %326 = dma.hbm_to_vmem [thread:$0]  %s7, 128, %s324, [#allocation8]
        $region40: #{residual_block.2} parent=11 // pred_fallthru
          _
        // Predicated region
        $region41: #{residual_block.2} parent=11 // pred_check
          %p327 = pneg %p216
        $region42: #{residual_block.2} parent=11 // pred_check_branch
          %329 = sbr.rel (%p327) target = $region44
        $region43: #{residual_block.2} parent=11 // pred_region
          %s331 = ssub.s32 128, 128
          %332 = vsyncadd [#allocation8], %s331
          %s334 = sshll.u32 [#allocation9], 4
          %s335 = int_to_ptr.vmem [resolvable:$true] %s334
          %337 = dma.hbm_to_vmem [thread:$0]  %s8, 128, %s335, [#allocation8]
        $region44: #{residual_block.2} parent=11 // pred_fallthru
          _
        // Predicated region
        $region45: #{residual_block.2} parent=11 // pred_check
          %p338 = pneg %p237
        $region46: #{residual_block.2} parent=11 // pred_check_branch
          %340 = sbr.rel (%p338) target = $region48
        $region47: #{residual_block.2} parent=11 // pred_region
          %s342 = ssub.s32 512, 512
          %343 = vsyncadd [#allocation11], %s342
          %s344 = sshll.u32 [#allocation10], 4
          %s345 = int_to_ptr.vmem [resolvable:$true] %s344
          %350 = dma.hbm_to_vmem [thread:$0]  %s9, 512, %s345, [#allocation11], 128, 128, 8
        $region48: #{residual_block.2} parent=11 // pred_fallthru
          _
      $region12: #{residual_block.2} parent=5 // pred_fallthru
        _
      %p351 = scmp.lt.s32.totalorder %s22, 2
      // Predicated region
      $region49: #{residual_block.2} parent=5 // pred_check
        %p352 = pneg %p351
      $region50: #{residual_block.2} parent=5 // pred_check_branch
        %354 = sbr.rel (%p352) target = $region52
      $region51: #{residual_block.2} parent=5 // pred_region
        // Predicated region
        $region53: #{residual_block.2} parent=51 // pred_check
          %p355 = pneg %p42
        $region54: #{residual_block.2} parent=51 // pred_check_branch
          %357 = sbr.rel (%p355) target = $region56
        $region55: #{residual_block.2} parent=51 // pred_region
          %s358 = sand.u32 %s32, 1
          %s359 = scalar_lea.sflag [#allocation3], %s358
          %s360 = sand.u32 %s32, 1
          %s361 = smul.addr %s360, 8
          %s362 = scalar_lea.vmem [#allocation2], %s361
          %s364 = ssub.s32 128, 128
          %365 = vsyncadd %s359, %s364
          %s366 = smul.addr %s22, 128
          %s367 = scalar_lea.hbm %s0, %s366
          %s369 = sshll.u32 %s362, 4
          %s370 = int_to_ptr.vmem [resolvable:$true] %s369
          %372 = dma.hbm_to_vmem [thread:$0]  %s367, 128, %s370, %s359
        $region56: #{residual_block.2} parent=51 // pred_fallthru
          _
      $region52: #{residual_block.2} parent=5 // pred_fallthru
        _
      %p373 = scmp.le.s32.totalorder 1, %s22
      %p374 = scmp.lt.s32.totalorder %s22, 3
      %p375 = pnand %p373, %p374
      %p376 = pneg %p375
      // Predicated region
      $region57: #{residual_block.2} parent=5 // pred_check
        _
      $region58: #{residual_block.2} parent=5 // pred_check_branch
        %378 = sbr.rel (%p375) target = $region60
      $region59: #{residual_block.2} parent=5 // pred_region
        %s379 = ssub.s32 %s22, 1
        %s380 = sand.u32 %s35, 1
        %s381 = scalar_lea.sflag [#allocation3], %s380
        %s382 = sand.u32 %s35, 1
        %s383 = smul.addr %s382, 8
        %s384 = scalar_lea.vmem [#allocation2], %s383
        // Predicated region
        $region61: #{residual_block.2} parent=59 // pred_check
          %p385 = pneg %p48
        $region62: #{residual_block.2} parent=59 // pred_check_branch
          %387 = sbr.rel (%p385) target = $region64
        $region63: #{residual_block.2} parent=59 // pred_region
          %388 = dma.done %s381, 128
        $region64: #{residual_block.2} parent=59 // pred_fallthru
          _
        // Predicated region
        $region65: #{residual_block.2} parent=59 // pred_check
          %p389 = pneg %p132
        $region66: #{residual_block.2} parent=59 // pred_check_branch
          %391 = sbr.rel (%p389) target = $region68
        $region67: #{residual_block.2} parent=59 // pred_region
          %392 = dma.done [#allocation5], 256
        $region68: #{residual_block.2} parent=59 // pred_fallthru
          _
        // Predicated region
        $region69: #{residual_block.2} parent=59 // pred_check
          %p393 = pneg %p174
        $region70: #{residual_block.2} parent=59 // pred_check_branch
          %395 = sbr.rel (%p393) target = $region72
        $region71: #{residual_block.2} parent=59 // pred_region
          %396 = dma.done [#allocation5], 256
        $region72: #{residual_block.2} parent=59 // pred_fallthru
          _
        // Predicated region
        $region73: #{residual_block.2} parent=59 // pred_check
          %p397 = pneg %p195
        $region74: #{residual_block.2} parent=59 // pred_check_branch
          %399 = sbr.rel (%p397) target = $region76
        $region75: #{residual_block.2} parent=59 // pred_region
          %400 = dma.done [#allocation8], 128
        $region76: #{residual_block.2} parent=59 // pred_fallthru
          _
        // Predicated region
        $region77: #{residual_block.2} parent=59 // pred_check
          %p401 = pneg %p216
        $region78: #{residual_block.2} parent=59 // pred_check_branch
          %403 = sbr.rel (%p401) target = $region80
        $region79: #{residual_block.2} parent=59 // pred_region
          %404 = dma.done [#allocation8], 128
        $region80: #{residual_block.2} parent=59 // pred_fallthru
          _
        // Predicated region
        $region81: #{residual_block.2} parent=59 // pred_check
          %p405 = pneg %p237
        $region82: #{residual_block.2} parent=59 // pred_check_branch
          %407 = sbr.rel (%p405) target = $region84
        $region83: #{residual_block.2} parent=59 // pred_region
          %408 = dma.done [#allocation11], 512
        $region84: #{residual_block.2} parent=59 // pred_fallthru
          _
        %s409 = sand.u32 %s35, 1
        %s410 = scalar_lea.sflag [#allocation3], %s409
        %s411 = sand.u32 %s35, 1
        %s412 = smul.addr %s411, 8
        %s413 = scalar_lea.vmem [#allocation2], %s412
        %p414 = pneg %p48
        %p415 = pneg %p45
        %p416 = pneg %p69
        %p417 = pneg %p66
        %p418 = pneg %p90
        %p419 = pneg %p87
        %p420 = pneg %p111
        %p421 = pneg %p108
        %p422 = pneg %p132
        %p423 = pneg %p129
        %p424 = pneg %p153
        %p425 = pneg %p150
        %p426 = pneg %p174
        %p427 = pneg %p171
        %p428 = pneg %p195
        %p429 = pneg %p192
        %p430 = pneg %p216
        %p431 = pneg %p213
        %p432 = pneg %p237
        %p433 = pneg %p234
        %p434 = pneg %p263
        %p435 = pneg %p260
        %p436 = scmp.lt.s32.totalorder %s27, 1
        %s437 = scalar_select %p436, %s27, 1
        %s438 = smul.addr %s437, 8
        %s439 = scalar_lea.vmem %s10, %s438
        %p440 = scmp.lt.s32.totalorder %s27, 1
        %s441 = scalar_select %p440, %s27, 1
        %s442 = smul.addr %s441, 8
        %s443 = scalar_lea.vmem %s10, %s442
        %v445 = vld [vmem:[%s384] sm:$0xff]
        %vm446 = vcmask 261120
        %v447 = vsel %vm446, %v445, 0.0
        %448 = vadd.xlane.f32.xlu0 %v447
        %v449 = vpop.xlane.xlu0 %448
        %v450 = vrcp.pop 32.0
        %v451 = vmul.f32 %v449, %v450
        %v452 = vsub.f32 %v445, %v451
        %v453 = vmul.f32 %v452, %v452
        %v454 = vsel %vm446, %v453, 0.0
        %455 = vadd.xlane.f32.xlu0 %v454
        %v456 = vpop.xlane.xlu0 %455
        %v457 = vmul.f32 %v456, %v450
        %v458 = vadd.f32 %v457, 1e-05
        %v459 = vrsqrt.pop %v458
        %v460 = vmul.f32 %v452, %v459
        %v461 = vld [vmem:[%s1] sm:$0x1]
        %v463 = vlaneseq
        %v464 = vshrl.u32 %v463, 7
        %v465 = vsub.s32 0, %v464
        %v466 = vrot.slane %v461, %v465
        %v468 = vmul.f32 %v460, %v466
        %v469 = vld [vmem:[%s2] sm:$0x1]
        %v471 = vlaneseq
        %v472 = vshrl.u32 %v471, 7
        %v473 = vsub.s32 0, %v472
        %v474 = vrot.slane %v469, %v473
        %v476 = vadd.f32 %v468, %v474
        %v477 = vpack.c.bf16 %v476, %v476
        %v478 = vld [vmem:[%s3] sm:$0xf]
        %v479 = vld [vmem:[%s3 + $0x4] sm:$0xf]
        %v480 = vld [vmem:[%s3 + $0x8] sm:$0xf]
        %v481 = vld [vmem:[%s3 + $0xc] sm:$0xf]
        %v486 = vunpack.c.l.b16 %v478
        %v487 = vunpack.c.l.b16 %v479
        %v488 = vunpack.c.l.b16 %v480
        %v489 = vunpack.c.l.b16 %v481
        %v490 = vpack.c.b16 %v487, %v486
        %v491 = vpack.c.b16 %v489, %v488
        %v495 = vsel %vm446, %v477, 0
        %497 = vmatprep.subr.bf16.mxu0 0
        %498 = vmatpush1.bf16.msra.mxu0 %v490
        %499 = vmatprep.subr.bf16.mxu0 0
        %500 = vmatpush1.bf16.msra.mxu0 %v491
        %501 = vmatprep.subr.bf16.mxu0 0
        %502 = vmatpush1.bf16.msra.mxu0 0
        %503 = vmatprep.subr.bf16.mxu0 0
        %504 = vmatpush1.bf16.msra.mxu0 0
        %505 = vmatprep.subr.bf16.mxu0 0
        %506 = vmatpush1.bf16.msra.mxu0 0
        %507 = vmatprep.subr.bf16.mxu0 0
        %508 = vmatpush1.bf16.msra.mxu0 0
        %509 = vmatprep.subr.bf16.mxu0 0
        %510 = vmatpush1.bf16.msra.mxu0 0
        %511 = vmatprep.subr.bf16.mxu0 0
        %512 = vmatpush1.bf16.msra.mxu0 0
        %513 = vmatprep.subr.bf16.mxu0 0
        %514 = vmatpush1.bf16.msra.mxu0 0
        %515 = vmatprep.subr.bf16.mxu0 0
        %516 = vmatpush1.bf16.msra.mxu0 0
        %517 = vmatprep.subr.bf16.mxu0 0
        %518 = vmatpush1.bf16.msra.mxu0 0
        %519 = vmatprep.subr.bf16.mxu0 0
        %520 = vmatpush1.bf16.msra.mxu0 0
        %521 = vmatprep.subr.bf16.mxu0 0
        %522 = vmatpush1.bf16.msra.mxu0 0
        %523 = vmatprep.subr.bf16.mxu0 0
        %524 = vmatpush1.bf16.msra.mxu0 0
        %525 = vmatprep.subr.bf16.mxu0 0
        %526 = vmatpush1.bf16.msra.mxu0 0
        %527 = vmatprep.subr.bf16.mxu0 0
        %528 = vmatpush1.bf16.msra.mxu0 0
        %529 = vmatprep.mubr.bf16.mxu0 0
        %530 = vmatmul.mubr.bf16.gmra.mrb[0].mxu0 %v495
        %v531 = vpop.f32.mrb[0].mxu0
        %v532 = vadd.f32 0.0, %v531
        %v533 = vpop.f32.mrb[0].mxu0
        %v534 = vpop.f32.mrb[0].mxu0
        %v535 = vpop.f32.mrb[0].mxu0
        %536 = vdwg.mxu0
        %v537 = vld [vmem:[#allocation4] sm:$0xf]
        %v538 = vld [vmem:[#allocation4 + $0x4] sm:$0xf]
        %v539 = vld [vmem:[#allocation4 + $0x8] sm:$0xf]
        %v540 = vld [vmem:[#allocation4 + $0xc] sm:$0xf]
        %v545 = vunpack.c.l.b16 %v537
        %v546 = vunpack.c.l.b16 %v538
        %v547 = vunpack.c.l.b16 %v539
        %v548 = vunpack.c.l.b16 %v540
        %v549 = vpack.c.b16 %v546, %v545
        %v550 = vpack.c.b16 %v548, %v547
        %553 = vmatprep.subr.bf16.mxu0 0
        %554 = vmatpush1.bf16.msra.mxu0 %v549
        %555 = vmatprep.subr.bf16.mxu0 0
        %556 = vmatpush1.bf16.msra.mxu0 %v550
        %557 = vmatprep.subr.bf16.mxu0 0
        %558 = vmatpush1.bf16.msra.mxu0 0
        %559 = vmatprep.subr.bf16.mxu0 0
        %560 = vmatpush1.bf16.msra.mxu0 0
        %561 = vmatprep.subr.bf16.mxu0 0
        %562 = vmatpush1.bf16.msra.mxu0 0
        %563 = vmatprep.subr.bf16.mxu0 0
        %564 = vmatpush1.bf16.msra.mxu0 0
        %565 = vmatprep.subr.bf16.mxu0 0
        %566 = vmatpush1.bf16.msra.mxu0 0
        %567 = vmatprep.subr.bf16.mxu0 0
        %568 = vmatpush1.bf16.msra.mxu0 0
        %569 = vmatprep.subr.bf16.mxu0 0
        %570 = vmatpush1.bf16.msra.mxu0 0
        %571 = vmatprep.subr.bf16.mxu0 0
        %572 = vmatpush1.bf16.msra.mxu0 0
        %573 = vmatprep.subr.bf16.mxu0 0
        %574 = vmatpush1.bf16.msra.mxu0 0
        %575 = vmatprep.subr.bf16.mxu0 0
        %576 = vmatpush1.bf16.msra.mxu0 0
        %577 = vmatprep.subr.bf16.mxu0 0
        %578 = vmatpush1.bf16.msra.mxu0 0
        %579 = vmatprep.subr.bf16.mxu0 0
        %580 = vmatpush1.bf16.msra.mxu0 0
        %581 = vmatprep.subr.bf16.mxu0 0
        %582 = vmatpush1.bf16.msra.mxu0 0
        %583 = vmatprep.subr.bf16.mxu0 0
        %584 = vmatpush1.bf16.msra.mxu0 0
        %585 = vmatprep.mubr.bf16.mxu0 0
        %586 = vmatmul.mubr.bf16.gmra.mrb[0].mxu0 %v495
        %v587 = vpop.f32.mrb[0].mxu0
        %v588 = vadd.f32 0.0, %v587
        %v589 = vpop.f32.mrb[0].mxu0
        %v590 = vpop.f32.mrb[0].mxu0
        %v591 = vpop.f32.mrb[0].mxu0
        %592 = vdwg.mxu0
        %v593 = vld [vmem:[%s5] sm:$0xf]
        %v594 = vld [vmem:[%s5 + $0x4] sm:$0xf]
        %v595 = vld [vmem:[%s5 + $0x8] sm:$0xf]
        %v596 = vld [vmem:[%s5 + $0xc] sm:$0xf]
        %v601 = vunpack.c.l.b16 %v593
        %v602 = vunpack.c.l.b16 %v594
        %v603 = vunpack.c.l.b16 %v595
        %v604 = vunpack.c.l.b16 %v596
        %v605 = vpack.c.b16 %v602, %v601
        %v606 = vpack.c.b16 %v604, %v603
        %609 = vmatprep.subr.bf16.mxu0 0
        %610 = vmatpush1.bf16.msra.mxu0 %v605
        %611 = vmatprep.subr.bf16.mxu0 0
        %612 = vmatpush1.bf16.msra.mxu0 %v606
        %613 = vmatprep.subr.bf16.mxu0 0
        %614 = vmatpush1.bf16.msra.mxu0 0
        %615 = vmatprep.subr.bf16.mxu0 0
        %616 = vmatpush1.bf16.msra.mxu0 0
        %617 = vmatprep.subr.bf16.mxu0 0
        %618 = vmatpush1.bf16.msra.mxu0 0
        %619 = vmatprep.subr.bf16.mxu0 0
        %620 = vmatpush1.bf16.msra.mxu0 0
        %621 = vmatprep.subr.bf16.mxu0 0
        %622 = vmatpush1.bf16.msra.mxu0 0
        %623 = vmatprep.subr.bf16.mxu0 0
        %624 = vmatpush1.bf16.msra.mxu0 0
        %625 = vmatprep.subr.bf16.mxu0 0
        %626 = vmatpush1.bf16.msra.mxu0 0
        %627 = vmatprep.subr.bf16.mxu0 0
        %628 = vmatpush1.bf16.msra.mxu0 0
        %629 = vmatprep.subr.bf16.mxu0 0
        %630 = vmatpush1.bf16.msra.mxu0 0
        %631 = vmatprep.subr.bf16.mxu0 0
        %632 = vmatpush1.bf16.msra.mxu0 0
        %633 = vmatprep.subr.bf16.mxu0 0
        %634 = vmatpush1.bf16.msra.mxu0 0
        %635 = vmatprep.subr.bf16.mxu0 0
        %636 = vmatpush1.bf16.msra.mxu0 0
        %637 = vmatprep.subr.bf16.mxu0 0
        %638 = vmatpush1.bf16.msra.mxu0 0
        %639 = vmatprep.subr.bf16.mxu0 0
        %640 = vmatpush1.bf16.msra.mxu0 0
        %641 = vmatprep.mubr.bf16.mxu0 0
        %642 = vmatmul.mubr.bf16.gmra.mrb[0].mxu0 %v495
        %v643 = vpop.f32.mrb[0].mxu0
        %v644 = vadd.f32 0.0, %v643
        %v645 = vpop.f32.mrb[0].mxu0
        %v646 = vpop.f32.mrb[0].mxu0
        %v647 = vpop.f32.mrb[0].mxu0
        %648 = vdwg.mxu0
        %v649 = vld [vmem:[#allocation7] sm:$0xff]
        %v650 = vld [vmem:[#allocation9] sm:$0xff]
        %v651 = vmul.f32 %v532, %v649
        %vm652 = vcmask 1047808
        %653 = vrot.lane.b32.xlu0 %v532, 32
        %v654 = vpop.permute.xlu0 %653
        %v655 = vsel %vm652, %v654, %v532
        %656 = vrot.lane.b32.xlu0 %v655, 32
        %v657 = vpop.permute.xlu0 %656
        %v658 = vsel %vm652, %v657, %v532
        %660 = vrot.lane.b32.xlu0 %v650, 16
        %v661 = vpop.permute.xlu0 %660
        %v663 = vmul.f32 %v658, %v661
        %665 = vrot.lane.b32.xlu0 %v663, 112
        %v666 = vpop.permute.xlu0 %665
        %v668 = vadd.f32 %v651, %v666
        %v669 = vmul.f32 %v588, %v649
        %670 = vrot.lane.b32.xlu0 %v588, 32
        %v671 = vpop.permute.xlu0 %670
        %v672 = vsel %vm652, %v671, %v588
        %673 = vrot.lane.b32.xlu0 %v672, 32
        %v674 = vpop.permute.xlu0 %673
        %v675 = vsel %vm652, %v674, %v588
        %v676 = vmul.f32 %v675, %v661
        %678 = vrot.lane.b32.xlu0 %v676, 112
        %v679 = vpop.permute.xlu0 %678
        %v681 = vadd.f32 %v669, %v679
        %v682 = vld [vmem:[#allocation10] sm:$0xff]
        %v683 = vld [vmem:[#allocation10 + $0x8] sm:$0xff]
        %v684 = vld [vmem:[#allocation10 + $0x10] sm:$0xff]
        %v685 = vld [vmem:[#allocation10 + $0x18] sm:$0xff]
        %v686 = vpack.c.bf16 %v644, %v644
        %v687 = vmul.f32 %v681, 0.25
        %v688 = vpack.c.bf16 %v687, %v687
        %689 = vxpose.xlu0.c.b16.start [1/8] %v686, 128
        %690 = vxpose.xlu0.c.b16.cont [2/8] 0, 128
        %691 = vxpose.xlu0.c.b16.cont [3/8] 0, 128
        %692 = vxpose.xlu0.c.b16.cont [4/8] 0, 128
        %693 = vxpose.xlu0.c.b16.cont [5/8] 0, 128
        %694 = vxpose.xlu0.c.b16.cont [6/8] 0, 128
        %695 = vxpose.xlu0.c.b16.cont [7/8] 0, 128
        %696 = vxpose.xlu0.c.b16.end [8/8] 0, 128
        %v697 = vpop.trf.xlu0
        %v698 = vpop.trf.xlu0
        %v699 = vpop.trf.xlu0
        %v700 = vpop.trf.xlu0
        %v701 = vpop.trf.xlu0
        %v702 = vpop.trf.xlu0
        %v703 = vpop.trf.xlu0
        %v704 = vpop.trf.xlu0
        %vm705 = vcmask 64512
        %v707 = vsel %vm705, %v697, 0
        %v710 = vsel %vm705, %v698, 0
        %vm712 = vcmask 1043456
        %v714 = vsel %vm712, %v688, 0
        %716 = vmatprep.subr.bf16.mxu0 0
        %717 = vmatpush1.bf16.msra.mxu0 %v714
        %718 = vmatprep.subr.bf16.mxu0 0
        %719 = vmatpush1.bf16.msra.mxu0 0
        %720 = vmatprep.subr.bf16.mxu0 0
        %721 = vmatpush1.bf16.msra.mxu0 0
        %722 = vmatprep.subr.bf16.mxu0 0
        %723 = vmatpush1.bf16.msra.mxu0 0
        %724 = vmatprep.subr.bf16.mxu0 0
        %725 = vmatpush1.bf16.msra.mxu0 0
        %726 = vmatprep.subr.bf16.mxu0 0
        %727 = vmatpush1.bf16.msra.mxu0 0
        %728 = vmatprep.subr.bf16.mxu0 0
        %729 = vmatpush1.bf16.msra.mxu0 0
        %730 = vmatprep.subr.bf16.mxu0 0
        %731 = vmatpush1.bf16.msra.mxu0 0
        %732 = vmatprep.subr.bf16.mxu0 0
        %733 = vmatpush1.bf16.msra.mxu0 0
        %734 = vmatprep.subr.bf16.mxu0 0
        %735 = vmatpush1.bf16.msra.mxu0 0
        %736 = vmatprep.subr.bf16.mxu0 0
        %737 = vmatpush1.bf16.msra.mxu0 0
        %738 = vmatprep.subr.bf16.mxu0 0
        %739 = vmatpush1.bf16.msra.mxu0 0
        %740 = vmatprep.subr.bf16.mxu0 0
        %741 = vmatpush1.bf16.msra.mxu0 0
        %742 = vmatprep.subr.bf16.mxu0 0
        %743 = vmatpush1.bf16.msra.mxu0 0
        %744 = vmatprep.subr.bf16.mxu0 0
        %745 = vmatpush1.bf16.msra.mxu0 0
        %746 = vmatprep.subr.bf16.mxu0 0
        %747 = vmatpush1.bf16.msra.mxu0 0
        %748 = vmatprep.mubr.bf16.mxu0 0
        %749 = vmatmul.mubr.bf16.gmra.mrb[0].mxu0 %v707
        %v750 = vpop.f32.mrb[0].mxu0
        %v751 = vadd.f32 0.0, %v750
        %v752 = vpop.f32.mrb[0].mxu0
        %v753 = vpop.f32.mrb[0].mxu0
        %v754 = vadd.f32 0.0, %v753
        %v755 = vpop.f32.mrb[0].mxu0
        %756 = vmatprep.mubr.bf16.mxu0 0
        %757 = vmatmul.mubr.bf16.gmra.mrb[0].mxu0 %v710
        %v758 = vpop.f32.mrb[0].mxu0
        %v759 = vadd.f32 0.0, %v758
        %v760 = vpop.f32.mrb[0].mxu0
        %v761 = vpop.f32.mrb[0].mxu0
        %v762 = vadd.f32 0.0, %v761
        %v763 = vpop.f32.mrb[0].mxu0
        %764 = vdwg.mxu0
        %vm765 = vcmp.gt.f32.partialorder %v682, 0.0
        %vm766 = vcmp.gt.f32.partialorder %v683, 0.0
        %vm767 = vcmp.gt.f32.partialorder %v684, 0.0
        %vm768 = vcmp.gt.f32.partialorder %v685, 0.0
        %v769 = vsel %vm765, %v751, -1e+30
        %v770 = vsel %vm766, %v754, -1e+30
        %v771 = vsel %vm767, %v759, -1e+30
        %v772 = vsel %vm768, %v762, -1e+30
        %v773 = vsel %vm446, %v769, -inf
        %v774 = vsel %vm446, %v770, -inf
        %v775 = vsel %vm446, %v771, -inf
        %v776 = vsel %vm446, %v772, -inf
        %v777 = vmax.f32 %v773, %v774
        %v778 = vmax.f32 %v775, %v776
        %v779 = vmax.f32 %v777, %v778
        %v780 = vrot.slane %v779, 4
        %v781 = vmax.f32 %v779, %v780
        %v782 = vrot.slane %v781, 2
        %v783 = vmax.f32 %v781, %v782
        %v784 = vrot.slane %v783, 1
        %v785 = vmax.f32 %v783, %v784
        %v786 = vsub.f32 %v769, %v785
        %v787 = vsub.f32 %v770, %v785
        %v788 = vsub.f32 %v771, %v785
        %v789 = vsub.f32 %v772, %v785
        %v790 = vmul.f32 %v786, 1.442695
        %v791 = vpow.pop %v790
        %v792 = vmul.f32 %v787, 1.442695
        %v793 = vpow.pop %v792
        %v794 = vmul.f32 %v788, 1.442695
        %v795 = vpow.pop %v794
        %v796 = vmul.f32 %v789, 1.442695
        %v797 = vpow.pop %v796
        %v798 = vsel %vm446, %v791, 0.0
        %v799 = vsel %vm446, %v793, 0.0
        %v800 = vadd.f32 %v798, %v799
        %v801 = vsel %vm446, %v795, 0.0
        %v802 = vadd.f32 %v800, %v801
        %v803 = vsel %vm446, %v797, 0.0
        %v804 = vadd.f32 %v802, %v803
        %v805 = vrot.slane %v804, 4
        %v806 = vadd.f32 %v804, %v805
        %v807 = vrot.slane %v806, 2
        %v808 = vadd.f32 %v806, %v807
        %v809 = vrot.slane %v808, 1
        %v810 = vadd.f32 %v808, %v809
        %v811 = vrcp.pop %v810
        %v812 = vmul.f32 %v791, %v811
        %v813 = vmul.f32 %v793, %v811
        %v814 = vmul.f32 %v795, %v811
        %v815 = vmul.f32 %v797, %v811
        %v816 = vsel %vm446, %v812, 0.0
        %v817 = vsel %vm446, %v813, 0.0
        %v818 = vadd.f32 %v816, %v817
        %v819 = vsel %vm446, %v814, 0.0
        %v820 = vadd.f32 %v818, %v819
        %v821 = vsel %vm446, %v815, 0.0
        %v822 = vadd.f32 %v820, %v821
        %v823 = vrot.slane %v822, 4
        %v824 = vadd.f32 %v822, %v823
        %v825 = vrot.slane %v824, 2
        %v826 = vadd.f32 %v824, %v825
        %v827 = vrot.slane %v826, 1
        %v828 = vadd.f32 %v826, %v827
        %v829 = vmul.f32 %v668, 0.25
        %v830 = vmul.f32 %v829, %v828
        %v831 = vsel %vm446, %v830, -inf
        %832 = vmax.xlane.f32.xlu0 %v831
        %v833 = vpop.xlane.xlu0 %832
        %v834 = vsub.f32 %v830, %v833
        %v835 = vmul.f32 %v834, 1.442695
        %v836 = vpow.pop %v835
        %v838 = vsel %vm446, %v836, 0
        %840 = vmatprep.subr.mxu0 0.0
        %841 = vmatpush1.msra.mxu0 %v682
        %842 = vmatprep.subr.mxu0 0.0
        %843 = vmatpush1.msra.mxu0 %v683
        %844 = vmatprep.subr.mxu0 0.0
        %845 = vmatpush1.msra.mxu0 %v684
        %846 = vmatprep.subr.mxu0 0.0
        %847 = vmatpush1.msra.mxu0 %v685
        %848 = vmatprep.subr.mxu0 0.0
        %849 = vmatpush1.msra.mxu0 0.0
        %850 = vmatprep.subr.mxu0 0.0
        %851 = vmatpush1.msra.mxu0 0.0
        %852 = vmatprep.subr.mxu0 0.0
        %853 = vmatpush1.msra.mxu0 0.0
        %854 = vmatprep.subr.mxu0 0.0
        %855 = vmatpush1.msra.mxu0 0.0
        %856 = vmatprep.subr.mxu0 0.0
        %857 = vmatpush1.msra.mxu0 0.0
        %858 = vmatprep.subr.mxu0 0.0
        %859 = vmatpush1.msra.mxu0 0.0
        %860 = vmatprep.subr.mxu0 0.0
        %861 = vmatpush1.msra.mxu0 0.0
        %862 = vmatprep.subr.mxu0 0.0
        %863 = vmatpush1.msra.mxu0 0.0
        %864 = vmatprep.subr.mxu0 0.0
        %865 = vmatpush1.msra.mxu0 0.0
        %866 = vmatprep.subr.mxu0 0.0
        %867 = vmatpush1.msra.mxu0 0.0
        %868 = vmatprep.subr.mxu0 0.0
        %869 = vmatpush1.msra.mxu0 0.0
        %870 = vmatprep.subr.mxu0 0.0
        %871 = vmatpush1.msra.mxu0 0.0
        %872 = vmatprep.subr.mxu0 0.0
        %873 = vmatpush1.msra.mxu0 0.0
        %874 = vmatprep.subr.mxu0 0.0
        %875 = vmatpush1.msra.mxu0 0.0
        %876 = vmatprep.subr.mxu0 0.0
        %877 = vmatpush1.msra.mxu0 0.0
        %878 = vmatprep.subr.mxu0 0.0
        %879 = vmatpush1.msra.mxu0 0.0
        %880 = vmatprep.subr.mxu0 0.0
        %881 = vmatpush1.msra.mxu0 0.0
        %882 = vmatprep.subr.mxu0 0.0
        %883 = vmatpush1.msra.mxu0 0.0
        %884 = vmatprep.subr.mxu0 0.0
        %885 = vmatpush1.msra.mxu0 0.0
        %886 = vmatprep.subr.mxu0 0.0
        %887 = vmatpush1.msra.mxu0 0.0
        %888 = vmatprep.subr.mxu0 0.0
        %889 = vmatpush1.msra.mxu0 0.0
        %890 = vmatprep.subr.mxu0 0.0
        %891 = vmatpush1.msra.mxu0 0.0
        %892 = vmatprep.subr.mxu0 0.0
        %893 = vmatpush1.msra.mxu0 0.0
        %894 = vmatprep.subr.mxu0 0.0
        %895 = vmatpush1.msra.mxu0 0.0
        %896 = vmatprep.subr.mxu0 0.0
        %897 = vmatpush1.msra.mxu0 0.0
        %898 = vmatprep.subr.mxu0 0.0
        %899 = vmatpush1.msra.mxu0 0.0
        %900 = vmatprep.subr.mxu0 0.0
        %901 = vmatpush1.msra.mxu0 0.0
        %902 = vmatprep.subr.mxu0 0.0
        %903 = vmatpush1.msra.mxu0 0.0
        %904 = vmatprep.mubr.f32.mxu0 0.0
        %905 = vmatmul.mubr.f32.gmra.mrb[0].mxu0 %v838
        %v906 = vpop.f32.mrb[0].mxu0
        %v907 = vadd.f32 0.0, %v906
        %v908 = vpop.f32.mrb[0].mxu0
        %909 = vdwg.mxu0
        %v910 = vmax.f32 %v907, 1e-30
        %v911 = vrcp.pop %v910
        %v912 = vmul.f32 %v836, %v911
        %v913 = vpack.c.bf16 %v912, %v912
        %v914 = vld [vmem:[#allocation6] sm:$0xf]
        %v915 = vld [vmem:[#allocation6 + $0x4] sm:$0xf]
        %v916 = vld [vmem:[#allocation6 + $0x8] sm:$0xf]
        %v917 = vld [vmem:[#allocation6 + $0xc] sm:$0xf]
        %v922 = vunpack.c.l.b16 %v914
        %v923 = vunpack.c.l.b16 %v915
        %v924 = vunpack.c.l.b16 %v916
        %v925 = vunpack.c.l.b16 %v917
        %v926 = vpack.c.b16 %v923, %v922
        %v927 = vpack.c.b16 %v925, %v924
        %v931 = vsel %vm446, %v913, 0
        %933 = vmatprep.subr.bf16.mxu0 0
        %934 = vmatpush1.bf16.msra.mxu0 %v926
        %935 = vmatprep.subr.bf16.mxu0 0
        %936 = vmatpush1.bf16.msra.mxu0 %v927
        %937 = vmatprep.subr.bf16.mxu0 0
        %938 = vmatpush1.bf16.msra.mxu0 0
        %939 = vmatprep.subr.bf16.mxu0 0
        %940 = vmatpush1.bf16.msra.mxu0 0
        %941 = vmatprep.subr.bf16.mxu0 0
        %942 = vmatpush1.bf16.msra.mxu0 0
        %943 = vmatprep.subr.bf16.mxu0 0
        %944 = vmatpush1.bf16.msra.mxu0 0
        %945 = vmatprep.subr.bf16.mxu0 0
        %946 = vmatpush1.bf16.msra.mxu0 0
        %947 = vmatprep.subr.bf16.mxu0 0
        %948 = vmatpush1.bf16.msra.mxu0 0
        %949 = vmatprep.subr.bf16.mxu0 0
        %950 = vmatpush1.bf16.msra.mxu0 0
        %951 = vmatprep.subr.bf16.mxu0 0
        %952 = vmatpush1.bf16.msra.mxu0 0
        %953 = vmatprep.subr.bf16.mxu0 0
        %954 = vmatpush1.bf16.msra.mxu0 0
        %955 = vmatprep.subr.bf16.mxu0 0
        %956 = vmatpush1.bf16.msra.mxu0 0
        %957 = vmatprep.subr.bf16.mxu0 0
        %958 = vmatpush1.bf16.msra.mxu0 0
        %959 = vmatprep.subr.bf16.mxu0 0
        %960 = vmatpush1.bf16.msra.mxu0 0
        %961 = vmatprep.subr.bf16.mxu0 0
        %962 = vmatpush1.bf16.msra.mxu0 0
        %963 = vmatprep.subr.bf16.mxu0 0
        %964 = vmatpush1.bf16.msra.mxu0 0
        %965 = vmatprep.mubr.bf16.mxu0 0
        %966 = vmatmul.mubr.bf16.gmra.mrb[0].mxu0 %v931
        %v967 = vpop.f32.mrb[0].mxu0
        %v968 = vadd.f32 0.0, %v967
        %v969 = vpop.f32.mrb[0].mxu0
        %v970 = vpop.f32.mrb[0].mxu0
        %v971 = vpop.f32.mrb[0].mxu0
        %972 = vdwg.mxu0
        %v973 = vadd.f32 %v445, %v968
        %974 = vst.msk [vmem:[%s443] sm:$0xff] %vm446, %v973
        %p975 = scmp.lt.s32.totalorder %s27, 1
        %s976 = scalar_select %p975, %s27, 1
        %s977 = smul.addr %s976, 8
        %s978 = scalar_lea.vmem %s10, %s977
        // Predicated region
        $region85: #{residual_block.2} parent=59 // pred_check
          %p979 = pneg %p260
        $region86: #{residual_block.2} parent=59 // pred_check_branch
          %981 = sbr.rel (%p979) target = $region88
        $region87: #{residual_block.2} parent=59 // pred_region
          _
        $region88: #{residual_block.2} parent=59 // pred_fallthru
          _
      $region60: #{residual_block.2} parent=5 // pred_fallthru
        _
      %p982 = scmp.le.s32.totalorder 2, %s22
      // Predicated region
      $region89: #{residual_block.2} parent=5 // pred_check
        %p983 = pneg %p982
      $region90: #{residual_block.2} parent=5 // pred_check_branch
        %985 = sbr.rel (%p983) target = $region92
      $region91: #{residual_block.2} parent=5 // pred_region
        %s986 = ssub.s32 %s22, 2
        // Predicated region
        $region93: #{residual_block.2} parent=91 // pred_check
          %p987 = pneg %p266
        $region94: #{residual_block.2} parent=91 // pred_check_branch
          %989 = sbr.rel (%p987) target = $region96
        $region95: #{residual_block.2} parent=91 // pred_region
          %p990 = scmp.lt.s32.totalorder %s28, 1
          %s991 = scalar_select %p990, %s28, 1
          %s992 = smul.addr %s991, 8
          %s993 = scalar_lea.vmem %s10, %s992
        $region96: #{residual_block.2} parent=91 // pred_fallthru
          _
      $region92: #{residual_block.2} parent=5 // pred_fallthru
        _
    $region6: #{residual_block.2} parent=1 // loop_footer
      %s26 = sadd.s32 1, %s22
    $region7: #{residual_block.2} parent=1 // loop_footer_branch
      %21 = sbr.rel target = $region3
    $region8: #{residual_block.2} parent=1 // loop_exit
      _
    %994 = vsyncpa [#allocation3], 1
    %s995 = scalar_lea.sflag [#allocation3], 1
    %996 = vsyncpa %s995, 1
    %997 = vsyncpa [#allocation5], 1
    %998 = vsyncpa [#allocation8], 1
    %999 = vsyncpa [#allocation11], 1

</llo_original>
